<compile_context>
chip_gen: v6e
topology: v6e:2x2x1
jax: 0.10.0
libtpu: 0.0.40
codegen_flags: <defaults>
</compile_context>

<pallas_src>
import functools
import math

import jax
import jax.numpy as jnp
from jax.experimental import pallas as pl
from jax.experimental.pallas import tpu as pltpu


def _round_up(n, m):
    return (n + m - 1) // m * m


def dqn_kernel(x_ref, w1_ref, b1_ref, w2_ref, b2_ref, w3t_ref, b3t_ref, out_ref):
    """One batch block of the fused 3-layer MLP.

    x_ref:   [block_b, n_obs]  f32  (streamed per grid step)
    w1_ref:  [n_obs, H]        f32  (resident)    b1_ref:  [1, H]      f32
    w2_ref:  [H, H]            bf16 (resident)    b2_ref:  [1, H]      f32
    w3t_ref: [n_pad, H]        bf16 (resident)    b3t_ref: [n_pad, 1]  f32
    out_ref: [n_pad, block_b]  f32  (transposed Q-values, batch on lanes)
    """
    x = x_ref[...]                                   # [block_b, n_obs] f32
    n_obs = x.shape[1]

    # Layer 1 on the VPU: K = n_obs is tiny, so a few broadcast-FMAs beat
    # padding K to 128 for the MXU (and keep f32 precision for this layer).
    h1 = b1_ref[...] + x[:, 0:1] * w1_ref[0:1, :]
    for k in range(1, n_obs):                        # static unroll, n_obs small
        h1 = h1 + x[:, k:k + 1] * w1_ref[k:k + 1, :]
    h1 = jnp.maximum(h1, 0.0)                        # [block_b, H] f32

    # Layer 2 on the MXU: bf16 inputs, f32 accumulate; bias + ReLU in f32 (VPU).
    h2 = jnp.dot(h1.astype(w2_ref.dtype), w2_ref[...],
                 preferred_element_type=jnp.float32)
    h2 = jnp.maximum(h2 + b2_ref[...], 0.0)          # [block_b, H] f32

    # Layer 3, computed transposed: out.T = w3.T @ h2.T  (A @ B.T on the MXU),
    # so the stored block is [n_pad, block_b] — 16x less writeback than a
    # 128-lane-padded [block_b, 128] output, still a lane-dense unmasked store.
    out_t = jax.lax.dot_general(
        w3t_ref[...], h2.astype(w3t_ref.dtype),
        dimension_numbers=(((1,), (1,)), ((), ())),
        preferred_element_type=jnp.float32)          # [n_pad, block_b] f32
    out_ref[...] = out_t + b3t_ref[...]


def prepare_params(w1, b1, w2, b2, w3, b3):
    """One-time (per weight update) padding / casting, hoisted off the forward
    path.  Weights are stored [in, out] (transposed vs. torch Linear.weight)."""
    hidden = w1.shape[1]
    n_actions = w3.shape[1]
    n_pad = _round_up(n_actions, 8)                  # sublane-pad action dim
    w3_t = jnp.zeros((n_pad, hidden), jnp.bfloat16).at[:n_actions, :].set(
        w3.T.astype(jnp.bfloat16))
    b3_t = jnp.zeros((n_pad, 1), jnp.float32).at[:n_actions, 0].set(
        b3.reshape(-1).astype(jnp.float32))
    return (w1.astype(jnp.float32),
            jnp.reshape(b1, (1, hidden)).astype(jnp.float32),
            w2.astype(jnp.bfloat16),
            jnp.reshape(b2, (1, hidden)).astype(jnp.float32),
            w3_t, b3_t)


def _default_block_b(B):
    """1 block for small batches / single-TC chips (avoid serial grid-step
    overhead), 2 even lane-dense blocks when the batch can feed 2 TensorCores."""
    n_tc = 1
    try:
        n_tc = max(1, int(getattr(jax.devices()[0], "num_cores", 1)))
    except Exception:
        pass
    n_blocks = 2 if (n_tc >= 2 and B >= 256) else 1
    return _round_up(max(-(-B // n_blocks), 8), 128)


@functools.partial(jax.jit, static_argnames=("n_actions", "block_b"))
def dqn_forward(x, w1, b1, w2, b2, w3_t, b3_t, *, n_actions, block_b=None):
    """Fused DQN forward.  x: [B, n_obs] f32 -> Q-values [B, n_actions] f32."""
    B, n_obs = x.shape
    hidden = w1.shape[1]
    n_pad = w3_t.shape[0]

    if block_b is None:
        block_b = _default_block_b(B)
    b_pad = _round_up(B, block_b)
    if b_pad != B:                                   # only for ragged batches
        x = jnp.zeros((b_pad, n_obs), x.dtype).at[:B].set(x)

    grid = (b_pad // block_b,)

    # Constant index_map -> weights/biases stay resident in VMEM; their DMA is
    # issued once for the whole grid, not per step.
    def resident(shape):
        return pl.BlockSpec(shape, lambda i: (0, 0))

    flops = 2 * b_pad * (n_obs * hidden + hidden * hidden + hidden * n_pad)
    bytes_accessed = (
        b_pad * n_obs * 4
        + sum(int(a.size) * a.dtype.itemsize
              for a in (w1, b1, w2, b2, w3_t, b3_t))
        + n_pad * b_pad * 4)

    out_t = pl.pallas_call(
        dqn_kernel,
        out_shape=jax.ShapeDtypeStruct((n_pad, b_pad), jnp.float32),
        grid=grid,
        in_specs=[
            pl.BlockSpec((block_b, n_obs), lambda i: (i, 0)),   # x: streamed
            resident(w1.shape), resident((1, hidden)),
            resident(w2.shape), resident((1, hidden)),
            resident(w3_t.shape), resident(b3_t.shape),
        ],
        out_specs=pl.BlockSpec((n_pad, block_b), lambda i: (0, i)),
        compiler_params=pltpu.CompilerParams(
            dimension_semantics=("parallel",)),      # batch blocks independent
        cost_estimate=pl.CostEstimate(
            flops=flops, transcendentals=0, bytes_accessed=bytes_accessed),
    )(x, w1, b1, w2, b2, w3_t, b3_t)

    # Strip the action-dim (8-pad) and batch padding; tiny (n_pad x B) read.
    return out_t[:n_actions, :B].T


def init_linear(key, fan_in, fan_out):
    """PyTorch nn.Linear default init: U(-1/sqrt(fan_in), +1/sqrt(fan_in)).
    Returns W already transposed to [fan_in, fan_out] and bias [fan_out]."""
    kw, kb = jax.random.split(key)
    bound = 1.0 / math.sqrt(fan_in)
    w = jax.random.uniform(kw, (fan_in, fan_out), jnp.float32, -bound, bound)
    b = jax.random.uniform(kb, (fan_out,), jnp.float32, -bound, bound)
    return w, b


if __name__ == "__main__":
    key = jax.random.PRNGKey(0)
    n_observations = 4   # e.g. CartPole observation dim
    n_actions = 2        # e.g. CartPole action dim
    batch = 512          # replay-batch-sized forward; 1 or 2 grid blocks

    k_x, k1, k2, k3 = jax.random.split(key, 4)
    x = jax.random.normal(k_x, (batch, n_observations), jnp.float32)

    w1, b1 = init_linear(k1, n_observations, 128)
    w2, b2 = init_linear(k2, 128, 128)
    w3, b3 = init_linear(k3, 128, n_actions)

    # Padding / bf16 casting happens once here, not on every forward call.
    params = prepare_params(w1, b1, w2, b2, w3, b3)

    out = dqn_forward(x, *params, n_actions=n_actions)
    out = jax.block_until_ready(out)
    assert out.shape == (batch, n_actions)

    # Reference with matching dtype plan (layer 1 in f32; layers 2-3 bf16
    # inputs with f32 accumulation).
    bf = jnp.bfloat16
    h1 = jnp.maximum(x @ w1 + b1[None, :], 0.0)
    h2 = jnp.maximum(
        jnp.dot(h1.astype(bf), w2.astype(bf), preferred_element_type=jnp.float32)
        + b2[None, :], 0.0)
    ref = jnp.dot(h2.astype(bf), w3.astype(bf),
                  preferred_element_type=jnp.float32) + b3[None, :]
    assert jnp.allclose(out, ref, atol=2e-2, rtol=2e-2), float(
        jnp.max(jnp.abs(out - ref)))

    # Loose sanity check against the pure-f32 PyTorch-equivalent forward.
    h1f = jnp.maximum(x @ w1 + b1[None, :], 0.0)
    h2f = jnp.maximum(h1f @ w2 + b2[None, :], 0.0)
    ref_f32 = h2f @ w3 + b3[None, :]
    assert jnp.allclose(out, ref_f32, atol=5e-2, rtol=5e-2), float(
        jnp.max(jnp.abs(out - ref_f32)))

    print("KERNEL_OK")
</pallas_src>

<mosaic_0001>
module attributes {stable_mosaic.version = 11 : i64} {
  func.func @dqn_kernel(%arg0: i32, %arg1: memref<512x4xf32, #tpu.memory_space<vmem>>, %arg2: memref<4x128xf32, #tpu.memory_space<vmem>>, %arg3: memref<1x128xf32, #tpu.memory_space<vmem>>, %arg4: memref<128x128xbf16, #tpu.memory_space<vmem>>, %arg5: memref<1x128xf32, #tpu.memory_space<vmem>>, %arg6: memref<8x128xbf16, #tpu.memory_space<vmem>>, %arg7: memref<8x1xf32, #tpu.memory_space<vmem>>, %arg8: memref<8x512xf32, #tpu.memory_space<vmem>>) attributes {dimension_semantics = [#tpu.dimension_semantics<parallel>], iteration_bounds = array<i64: 1>, scalar_prefetch = 0 : i64, scratch_operands = 0 : i64, tpu.core_type = #tpu.core_type<tc>, window_params = [{transform_indices = @transform_0, window_bounds = array<i64: 512, 4>}, {pipeline_mode = #tpu.pipeline_mode<synchronous>, transform_indices = @transform_1, window_bounds = array<i64: 4, 128>}, {pipeline_mode = #tpu.pipeline_mode<synchronous>, transform_indices = @transform_2, window_bounds = array<i64: 1, 128>}, {pipeline_mode = #tpu.pipeline_mode<synchronous>, transform_indices = @transform_3, window_bounds = array<i64: 128, 128>}, {pipeline_mode = #tpu.pipeline_mode<synchronous>, transform_indices = @transform_4, window_bounds = array<i64: 1, 128>}, {pipeline_mode = #tpu.pipeline_mode<synchronous>, transform_indices = @transform_5, window_bounds = array<i64: 8, 128>}, {pipeline_mode = #tpu.pipeline_mode<synchronous>, transform_indices = @transform_6, window_bounds = array<i64: 8, 1>}, {transform_indices = @transform_7, window_bounds = array<i64: 8, 512>}]} {
    %c0 = arith.constant 0 : index
    %c0_0 = arith.constant 0 : index
    %0 = vector.load %arg1[%c0, %c0_0] : memref<512x4xf32, #tpu.memory_space<vmem>>, vector<512x4xf32>
    %c0_1 = arith.constant 0 : index
    %c0_2 = arith.constant 0 : index
    %1 = vector.load %arg3[%c0_1, %c0_2] : memref<1x128xf32, #tpu.memory_space<vmem>>, vector<1x128xf32>
    %2 = vector.extract_strided_slice %0 {offsets = [0, 0], sizes = [512, 1], strides = [1, 1]} : vector<512x4xf32> to vector<512x1xf32>
    %c0_3 = arith.constant 0 : index
    %c0_4 = arith.constant 0 : index
    %3 = vector.load %arg2[%c0_3, %c0_4] : memref<4x128xf32, #tpu.memory_space<vmem>>, vector<1x128xf32>
    %4 = vector.broadcast %2 : vector<512x1xf32> to vector<512x128xf32>
    %5 = vector.broadcast %3 : vector<1x128xf32> to vector<512x128xf32>
    %6 = arith.mulf %4, %5 : vector<512x128xf32>
    %7 = vector.broadcast %1 : vector<1x128xf32> to vector<512x128xf32>
    %8 = arith.addf %7, %6 : vector<512x128xf32>
    %9 = vector.extract_strided_slice %0 {offsets = [0, 1], sizes = [512, 1], strides = [1, 1]} : vector<512x4xf32> to vector<512x1xf32>
    %c1 = arith.constant 1 : index
    %c0_5 = arith.constant 0 : index
    %10 = vector.load %arg2[%c1, %c0_5] : memref<4x128xf32, #tpu.memory_space<vmem>>, vector<1x128xf32>
    %11 = vector.broadcast %9 : vector<512x1xf32> to vector<512x128xf32>
    %12 = vector.broadcast %10 : vector<1x128xf32> to vector<512x128xf32>
    %13 = arith.mulf %11, %12 : vector<512x128xf32>
    %14 = arith.addf %8, %13 : vector<512x128xf32>
    %15 = vector.extract_strided_slice %0 {offsets = [0, 2], sizes = [512, 1], strides = [1, 1]} : vector<512x4xf32> to vector<512x1xf32>
    %c2 = arith.constant 2 : index
    %c0_6 = arith.constant 0 : index
    %16 = vector.load %arg2[%c2, %c0_6] : memref<4x128xf32, #tpu.memory_space<vmem>>, vector<1x128xf32>
    %17 = vector.broadcast %15 : vector<512x1xf32> to vector<512x128xf32>
    %18 = vector.broadcast %16 : vector<1x128xf32> to vector<512x128xf32>
    %19 = arith.mulf %17, %18 : vector<512x128xf32>
    %20 = arith.addf %14, %19 : vector<512x128xf32>
    %21 = vector.extract_strided_slice %0 {offsets = [0, 3], sizes = [512, 1], strides = [1, 1]} : vector<512x4xf32> to vector<512x1xf32>
    %c3 = arith.constant 3 : index
    %c0_7 = arith.constant 0 : index
    %22 = vector.load %arg2[%c3, %c0_7] : memref<4x128xf32, #tpu.memory_space<vmem>>, vector<1x128xf32>
    %23 = vector.broadcast %21 : vector<512x1xf32> to vector<512x128xf32>
    %24 = vector.broadcast %22 : vector<1x128xf32> to vector<512x128xf32>
    %25 = arith.mulf %23, %24 : vector<512x128xf32>
    %26 = arith.addf %20, %25 : vector<512x128xf32>
    %cst = arith.constant 0.000000e+00 : f32
    %27 = vector.broadcast %cst : f32 to vector<512x128xf32>
    %28 = arith.maximumf %26, %27 : vector<512x128xf32>
    %29 = arith.truncf %28 : vector<512x128xf32> to vector<512x128xbf16>
    %c0_8 = arith.constant 0 : index
    %c0_9 = arith.constant 0 : index
    %30 = vector.load %arg4[%c0_8, %c0_9] : memref<128x128xbf16, #tpu.memory_space<vmem>>, vector<128x128xbf16>
    %cst_10 = arith.constant dense<0.000000e+00> : vector<512x128xf32>
    %31 = tpu.matmul %29, %30, %cst_10 {dimension_numbers = #tpu.dot_dimension_numbers<[1], [0], [0], [1], [0, 0, 1, 1], [], []>} : vector<512x128xbf16>, vector<128x128xbf16>, vector<512x128xf32> -> vector<512x128xf32>
    %c0_11 = arith.constant 0 : index
    %c0_12 = arith.constant 0 : index
    %32 = vector.load %arg5[%c0_11, %c0_12] : memref<1x128xf32, #tpu.memory_space<vmem>>, vector<1x128xf32>
    %33 = vector.broadcast %32 : vector<1x128xf32> to vector<512x128xf32>
    %34 = arith.addf %31, %33 : vector<512x128xf32>
    %cst_13 = arith.constant 0.000000e+00 : f32
    %35 = vector.broadcast %cst_13 : f32 to vector<512x128xf32>
    %36 = arith.maximumf %34, %35 : vector<512x128xf32>
    %c0_14 = arith.constant 0 : index
    %c0_15 = arith.constant 0 : index
    %37 = vector.load %arg6[%c0_14, %c0_15] : memref<8x128xbf16, #tpu.memory_space<vmem>>, vector<8x128xbf16>
    %38 = arith.truncf %36 : vector<512x128xf32> to vector<512x128xbf16>
    %cst_16 = arith.constant dense<0.000000e+00> : vector<8x512xf32>
    %39 = tpu.matmul %37, %38, %cst_16 {dimension_numbers = #tpu.dot_dimension_numbers<[1], [1], [0], [0], [0, 0, 1, 0], [], []>} : vector<8x128xbf16>, vector<512x128xbf16>, vector<8x512xf32> -> vector<8x512xf32>
    %c0_17 = arith.constant 0 : index
    %c0_18 = arith.constant 0 : index
    %40 = vector.load %arg7[%c0_17, %c0_18] : memref<8x1xf32, #tpu.memory_space<vmem>>, vector<8x1xf32>
    %41 = vector.broadcast %40 : vector<8x1xf32> to vector<8x512xf32>
    %42 = arith.addf %39, %41 : vector<8x512xf32>
    %c0_19 = arith.constant 0 : index
    %c0_20 = arith.constant 0 : index
    %43 = vector.load %arg8[%c0_19, %c0_20] : memref<8x512xf32, #tpu.memory_space<vmem>>, vector<8x512xf32>
    tpu.vector_store %arg8[%c0_19, %c0_20], %42 {strides = array<i32>} : memref<8x512xf32, #tpu.memory_space<vmem>>, vector<8x512xf32>,
    return
  }
  func.func @transform_0(%arg0: i32) -> (i32, i32) {
    %c0_i32 = arith.constant 0 : i32
    %c0_i32_0 = arith.constant 0 : i32
    return %arg0, %c0_i32 : i32, i32
  }
  func.func @transform_1(%arg0: i32) -> (i32, i32) {
    %c0_i32 = arith.constant 0 : i32
    %c0_i32_0 = arith.constant 0 : i32
    %c0_i32_1 = arith.constant 0 : i32
    return %c0_i32, %c0_i32_0 : i32, i32
  }
  func.func @transform_2(%arg0: i32) -> (i32, i32) {
    %c0_i32 = arith.constant 0 : i32
    %c0_i32_0 = arith.constant 0 : i32
    %c0_i32_1 = arith.constant 0 : i32
    return %c0_i32, %c0_i32_0 : i32, i32
  }
  func.func @transform_3(%arg0: i32) -> (i32, i32) {
    %c0_i32 = arith.constant 0 : i32
    %c0_i32_0 = arith.constant 0 : i32
    %c0_i32_1 = arith.constant 0 : i32
    return %c0_i32, %c0_i32_0 : i32, i32
  }
  func.func @transform_4(%arg0: i32) -> (i32, i32) {
    %c0_i32 = arith.constant 0 : i32
    %c0_i32_0 = arith.constant 0 : i32
    %c0_i32_1 = arith.constant 0 : i32
    return %c0_i32, %c0_i32_0 : i32, i32
  }
  func.func @transform_5(%arg0: i32) -> (i32, i32) {
    %c0_i32 = arith.constant 0 : i32
    %c0_i32_0 = arith.constant 0 : i32
    %c0_i32_1 = arith.constant 0 : i32
    return %c0_i32, %c0_i32_0 : i32, i32
  }
  func.func @transform_6(%arg0: i32) -> (i32, i32) {
    %c0_i32 = arith.constant 0 : i32
    %c0_i32_0 = arith.constant 0 : i32
    %c0_i32_1 = arith.constant 0 : i32
    return %c0_i32, %c0_i32_0 : i32, i32
  }
  func.func @transform_7(%arg0: i32) -> (i32, i32) {
    %c0_i32 = arith.constant 0 : i32
    %c0_i32_0 = arith.constant 0 : i32
    return %c0_i32, %arg0 : i32, i32
  }
}

</mosaic_0001>

<llo_original>
// kernel: dqn_forward.1
$region0: #{dqn_forward.1}
  #allocation0 [shape = 'u32[]', space=smem, size = 0x4, offset = 0x4, fixed_abs, tag = 'smem constant byte address 0x4 - core index']
  #allocation1 [shape = 'u32[144,128]{1,0:T(1,128)}', space=vmem, size = 0x12000, scoped, tag = 'internal scratch']
  %s0 = inlined_call_operand.vmem [shape: f32[512,4], index: 0, kind: input, shape index: {}]
  %s1 = inlined_call_operand.vmem [shape: f32[4,128], index: 1, kind: input, shape index: {}]
  %s2 = inlined_call_operand.vmem [shape: f32[1,128], index: 2, kind: input, shape index: {}]
  %s3 = inlined_call_operand.vmem [shape: bf16[128,128], index: 3, kind: input, shape index: {}]
  %s4 = inlined_call_operand.vmem [shape: f32[1,128], index: 4, kind: input, shape index: {}]
  %s5 = inlined_call_operand.vmem [shape: bf16[8,128], index: 5, kind: input, shape index: {}]
  %s6 = inlined_call_operand.vmem [shape: f32[8,1], index: 6, kind: input, shape index: {}]
  %s7 = inlined_call_operand.vmem [shape: f32[8,512], index: 7, kind: output, shape index: {}]
  %s8 = sld [smem:[#allocation0]]
  $region38: #{dqn_forward.1} parent=0
    _
  %s10 = ssub.s32 1, %s8
  %s11 = scalar_select 0, %s10, %s8
  // Predicated region
  $region2: #{dqn_forward.1} parent=0 // pred_check
    _
  $region3: #{dqn_forward.1} parent=0 // pred_check_branch
    %13 = sbr.rel (0) target = $region5
  $region4: #{dqn_forward.1} parent=0 // pred_region
    _
  $region5: #{dqn_forward.1} parent=0 // pred_fallthru
    _
  // Predicated region
  $region6: #{dqn_forward.1} parent=0 // pred_check
    _
  $region7: #{dqn_forward.1} parent=0 // pred_check_branch
    %15 = sbr.rel (0) target = $region9
  $region8: #{dqn_forward.1} parent=0 // pred_region
    _
  $region9: #{dqn_forward.1} parent=0 // pred_fallthru
    _
  // Predicated region
  $region10: #{dqn_forward.1} parent=0 // pred_check
    _
  $region11: #{dqn_forward.1} parent=0 // pred_check_branch
    %17 = sbr.rel (0) target = $region13
  $region12: #{dqn_forward.1} parent=0 // pred_region
    _
  $region13: #{dqn_forward.1} parent=0 // pred_fallthru
    _
  // Predicated region
  $region14: #{dqn_forward.1} parent=0 // pred_check
    _
  $region15: #{dqn_forward.1} parent=0 // pred_check_branch
    %19 = sbr.rel (0) target = $region17
  $region16: #{dqn_forward.1} parent=0 // pred_region
    _
  $region17: #{dqn_forward.1} parent=0 // pred_fallthru
    _
  // Predicated region
  $region18: #{dqn_forward.1} parent=0 // pred_check
    _
  $region19: #{dqn_forward.1} parent=0 // pred_check_branch
    %21 = sbr.rel (0) target = $region21
  $region20: #{dqn_forward.1} parent=0 // pred_region
    _
  $region21: #{dqn_forward.1} parent=0 // pred_fallthru
    _
  // Predicated region
  $region22: #{dqn_forward.1} parent=0 // pred_check
    _
  $region23: #{dqn_forward.1} parent=0 // pred_check_branch
    %23 = sbr.rel (0) target = $region25
  $region24: #{dqn_forward.1} parent=0 // pred_region
    _
  $region25: #{dqn_forward.1} parent=0 // pred_fallthru
    _
  // Predicated region
  $region26: #{dqn_forward.1} parent=0 // pred_check
    _
  $region27: #{dqn_forward.1} parent=0 // pred_check_branch
    %25 = sbr.rel (0) target = $region29
  $region28: #{dqn_forward.1} parent=0 // pred_region
    _
  $region29: #{dqn_forward.1} parent=0 // pred_fallthru
    _
  %v27 = vld [vmem:[%s0] sm:$0xff]
  %v28 = vld [vmem:[%s0 + $0x8] sm:$0xff]
  %v29 = vld [vmem:[%s0 + $0x10] sm:$0xff]
  %v30 = vld [vmem:[%s0 + $0x18] sm:$0xff]
  %v31 = vld [vmem:[%s0 + $0x20] sm:$0xff]
  %v32 = vld [vmem:[%s0 + $0x28] sm:$0xff]
  %v33 = vld [vmem:[%s0 + $0x30] sm:$0xff]
  %v34 = vld [vmem:[%s0 + $0x38] sm:$0xff]
  %v35 = vld [vmem:[%s0 + $0x40] sm:$0xff]
  %v36 = vld [vmem:[%s0 + $0x48] sm:$0xff]
  %v37 = vld [vmem:[%s0 + $0x50] sm:$0xff]
  %v38 = vld [vmem:[%s0 + $0x58] sm:$0xff]
  %v39 = vld [vmem:[%s0 + $0x60] sm:$0xff]
  %v40 = vld [vmem:[%s0 + $0x68] sm:$0xff]
  %v41 = vld [vmem:[%s0 + $0x70] sm:$0xff]
  %v42 = vld [vmem:[%s0 + $0x78] sm:$0xff]
  %v43 = vld [vmem:[%s0 + $0x80] sm:$0xff]
  %v44 = vld [vmem:[%s0 + $0x88] sm:$0xff]
  %v45 = vld [vmem:[%s0 + $0x90] sm:$0xff]
  %v46 = vld [vmem:[%s0 + $0x98] sm:$0xff]
  %v47 = vld [vmem:[%s0 + $0xa0] sm:$0xff]
  %v48 = vld [vmem:[%s0 + $0xa8] sm:$0xff]
  %v49 = vld [vmem:[%s0 + $0xb0] sm:$0xff]
  %v50 = vld [vmem:[%s0 + $0xb8] sm:$0xff]
  %v51 = vld [vmem:[%s0 + $0xc0] sm:$0xff]
  %v52 = vld [vmem:[%s0 + $0xc8] sm:$0xff]
  %v53 = vld [vmem:[%s0 + $0xd0] sm:$0xff]
  %v54 = vld [vmem:[%s0 + $0xd8] sm:$0xff]
  %v55 = vld [vmem:[%s0 + $0xe0] sm:$0xff]
  %v56 = vld [vmem:[%s0 + $0xe8] sm:$0xff]
  %v57 = vld [vmem:[%s0 + $0xf0] sm:$0xff]
  %v58 = vld [vmem:[%s0 + $0xf8] sm:$0xff]
  %v59 = vld [vmem:[%s0 + $0x100] sm:$0xff]
  %v60 = vld [vmem:[%s0 + $0x108] sm:$0xff]
  %v61 = vld [vmem:[%s0 + $0x110] sm:$0xff]
  %v62 = vld [vmem:[%s0 + $0x118] sm:$0xff]
  %v63 = vld [vmem:[%s0 + $0x120] sm:$0xff]
  %v64 = vld [vmem:[%s0 + $0x128] sm:$0xff]
  %v65 = vld [vmem:[%s0 + $0x130] sm:$0xff]
  %v66 = vld [vmem:[%s0 + $0x138] sm:$0xff]
  %v67 = vld [vmem:[%s0 + $0x140] sm:$0xff]
  %v68 = vld [vmem:[%s0 + $0x148] sm:$0xff]
  %v69 = vld [vmem:[%s0 + $0x150] sm:$0xff]
  %v70 = vld [vmem:[%s0 + $0x158] sm:$0xff]
  %v71 = vld [vmem:[%s0 + $0x160] sm:$0xff]
  %v72 = vld [vmem:[%s0 + $0x168] sm:$0xff]
  %v73 = vld [vmem:[%s0 + $0x170] sm:$0xff]
  %v74 = vld [vmem:[%s0 + $0x178] sm:$0xff]
  %v75 = vld [vmem:[%s0 + $0x180] sm:$0xff]
  %v76 = vld [vmem:[%s0 + $0x188] sm:$0xff]
  %v77 = vld [vmem:[%s0 + $0x190] sm:$0xff]
  %v78 = vld [vmem:[%s0 + $0x198] sm:$0xff]
  %v79 = vld [vmem:[%s0 + $0x1a0] sm:$0xff]
  %v80 = vld [vmem:[%s0 + $0x1a8] sm:$0xff]
  %v81 = vld [vmem:[%s0 + $0x1b0] sm:$0xff]
  %v82 = vld [vmem:[%s0 + $0x1b8] sm:$0xff]
  %v83 = vld [vmem:[%s0 + $0x1c0] sm:$0xff]
  %v84 = vld [vmem:[%s0 + $0x1c8] sm:$0xff]
  %v85 = vld [vmem:[%s0 + $0x1d0] sm:$0xff]
  %v86 = vld [vmem:[%s0 + $0x1d8] sm:$0xff]
  %v87 = vld [vmem:[%s0 + $0x1e0] sm:$0xff]
  %v88 = vld [vmem:[%s0 + $0x1e8] sm:$0xff]
  %v89 = vld [vmem:[%s0 + $0x1f0] sm:$0xff]
  %v90 = vld [vmem:[%s0 + $0x1f8] sm:$0xff]
  %v91 = vld [vmem:[%s2] sm:$0x1]
  %v92 = vld [vmem:[%s1] sm:$0x1]
  %94 = vset.pattern.permute.xlu0 0
  %95 = vperm.xlu0 %94, %v27
  %v96 = vpop.permute.xlu0 %95
  %99 = vset.pattern.permute.xlu0 0
  %100 = vperm.xlu0 %99, %v28
  %v101 = vpop.permute.xlu0 %100
  %104 = vset.pattern.permute.xlu0 0
  %105 = vperm.xlu0 %104, %v29
  %v106 = vpop.permute.xlu0 %105
  %109 = vset.pattern.permute.xlu0 0
  %110 = vperm.xlu0 %109, %v30
  %v111 = vpop.permute.xlu0 %110
  %114 = vset.pattern.permute.xlu0 0
  %115 = vperm.xlu0 %114, %v31
  %v116 = vpop.permute.xlu0 %115
  %119 = vset.pattern.permute.xlu0 0
  %120 = vperm.xlu0 %119, %v32
  %v121 = vpop.permute.xlu0 %120
  %124 = vset.pattern.permute.xlu0 0
  %125 = vperm.xlu0 %124, %v33
  %v126 = vpop.permute.xlu0 %125
  %129 = vset.pattern.permute.xlu0 0
  %130 = vperm.xlu0 %129, %v34
  %v131 = vpop.permute.xlu0 %130
  %134 = vset.pattern.permute.xlu0 0
  %135 = vperm.xlu0 %134, %v35
  %v136 = vpop.permute.xlu0 %135
  %139 = vset.pattern.permute.xlu0 0
  %140 = vperm.xlu0 %139, %v36
  %v141 = vpop.permute.xlu0 %140
  %144 = vset.pattern.permute.xlu0 0
  %145 = vperm.xlu0 %144, %v37
  %v146 = vpop.permute.xlu0 %145
  %149 = vset.pattern.permute.xlu0 0
  %150 = vperm.xlu0 %149, %v38
  %v151 = vpop.permute.xlu0 %150
  %154 = vset.pattern.permute.xlu0 0
  %155 = vperm.xlu0 %154, %v39
  %v156 = vpop.permute.xlu0 %155
  %159 = vset.pattern.permute.xlu0 0
  %160 = vperm.xlu0 %159, %v40
  %v161 = vpop.permute.xlu0 %160
  %164 = vset.pattern.permute.xlu0 0
  %165 = vperm.xlu0 %164, %v41
  %v166 = vpop.permute.xlu0 %165
  %169 = vset.pattern.permute.xlu0 0
  %170 = vperm.xlu0 %169, %v42
  %v171 = vpop.permute.xlu0 %170
  %174 = vset.pattern.permute.xlu0 0
  %175 = vperm.xlu0 %174, %v43
  %v176 = vpop.permute.xlu0 %175
  %179 = vset.pattern.permute.xlu0 0
  %180 = vperm.xlu0 %179, %v44
  %v181 = vpop.permute.xlu0 %180
  %184 = vset.pattern.permute.xlu0 0
  %185 = vperm.xlu0 %184, %v45
  %v186 = vpop.permute.xlu0 %185
  %189 = vset.pattern.permute.xlu0 0
  %190 = vperm.xlu0 %189, %v46
  %v191 = vpop.permute.xlu0 %190
  %194 = vset.pattern.permute.xlu0 0
  %195 = vperm.xlu0 %194, %v47
  %v196 = vpop.permute.xlu0 %195
  %199 = vset.pattern.permute.xlu0 0
  %200 = vperm.xlu0 %199, %v48
  %v201 = vpop.permute.xlu0 %200
  %204 = vset.pattern.permute.xlu0 0
  %205 = vperm.xlu0 %204, %v49
  %v206 = vpop.permute.xlu0 %205
  %209 = vset.pattern.permute.xlu0 0
  %210 = vperm.xlu0 %209, %v50
  %v211 = vpop.permute.xlu0 %210
  %214 = vset.pattern.permute.xlu0 0
  %215 = vperm.xlu0 %214, %v51
  %v216 = vpop.permute.xlu0 %215
  %219 = vset.pattern.permute.xlu0 0
  %220 = vperm.xlu0 %219, %v52
  %v221 = vpop.permute.xlu0 %220
  %224 = vset.pattern.permute.xlu0 0
  %225 = vperm.xlu0 %224, %v53
  %v226 = vpop.permute.xlu0 %225
  %229 = vset.pattern.permute.xlu0 0
  %230 = vperm.xlu0 %229, %v54
  %v231 = vpop.permute.xlu0 %230
  %234 = vset.pattern.permute.xlu0 0
  %235 = vperm.xlu0 %234, %v55
  %v236 = vpop.permute.xlu0 %235
  %239 = vset.pattern.permute.xlu0 0
  %240 = vperm.xlu0 %239, %v56
  %v241 = vpop.permute.xlu0 %240
  %244 = vset.pattern.permute.xlu0 0
  %245 = vperm.xlu0 %244, %v57
  %v246 = vpop.permute.xlu0 %245
  %249 = vset.pattern.permute.xlu0 0
  %250 = vperm.xlu0 %249, %v58
  %v251 = vpop.permute.xlu0 %250
  %254 = vset.pattern.permute.xlu0 0
  %255 = vperm.xlu0 %254, %v59
  %v256 = vpop.permute.xlu0 %255
  %259 = vset.pattern.permute.xlu0 0
  %260 = vperm.xlu0 %259, %v60
  %v261 = vpop.permute.xlu0 %260
  %264 = vset.pattern.permute.xlu0 0
  %265 = vperm.xlu0 %264, %v61
  %v266 = vpop.permute.xlu0 %265
  %269 = vset.pattern.permute.xlu0 0
  %270 = vperm.xlu0 %269, %v62
  %v271 = vpop.permute.xlu0 %270
  %274 = vset.pattern.permute.xlu0 0
  %275 = vperm.xlu0 %274, %v63
  %v276 = vpop.permute.xlu0 %275
  %279 = vset.pattern.permute.xlu0 0
  %280 = vperm.xlu0 %279, %v64
  %v281 = vpop.permute.xlu0 %280
  %284 = vset.pattern.permute.xlu0 0
  %285 = vperm.xlu0 %284, %v65
  %v286 = vpop.permute.xlu0 %285
  %289 = vset.pattern.permute.xlu0 0
  %290 = vperm.xlu0 %289, %v66
  %v291 = vpop.permute.xlu0 %290
  %294 = vset.pattern.permute.xlu0 0
  %295 = vperm.xlu0 %294, %v67
  %v296 = vpop.permute.xlu0 %295
  %299 = vset.pattern.permute.xlu0 0
  %300 = vperm.xlu0 %299, %v68
  %v301 = vpop.permute.xlu0 %300
  %304 = vset.pattern.permute.xlu0 0
  %305 = vperm.xlu0 %304, %v69
  %v306 = vpop.permute.xlu0 %305
  %309 = vset.pattern.permute.xlu0 0
  %310 = vperm.xlu0 %309, %v70
  %v311 = vpop.permute.xlu0 %310
  %314 = vset.pattern.permute.xlu0 0
  %315 = vperm.xlu0 %314, %v71
  %v316 = vpop.permute.xlu0 %315
  %319 = vset.pattern.permute.xlu0 0
  %320 = vperm.xlu0 %319, %v72
  %v321 = vpop.permute.xlu0 %320
  %324 = vset.pattern.permute.xlu0 0
  %325 = vperm.xlu0 %324, %v73
  %v326 = vpop.permute.xlu0 %325
  %329 = vset.pattern.permute.xlu0 0
  %330 = vperm.xlu0 %329, %v74
  %v331 = vpop.permute.xlu0 %330
  %334 = vset.pattern.permute.xlu0 0
  %335 = vperm.xlu0 %334, %v75
  %v336 = vpop.permute.xlu0 %335
  %339 = vset.pattern.permute.xlu0 0
  %340 = vperm.xlu0 %339, %v76
  %v341 = vpop.permute.xlu0 %340
  %344 = vset.pattern.permute.xlu0 0
  %345 = vperm.xlu0 %344, %v77
  %v346 = vpop.permute.xlu0 %345
  %349 = vset.pattern.permute.xlu0 0
  %350 = vperm.xlu0 %349, %v78
  %v351 = vpop.permute.xlu0 %350
  %354 = vset.pattern.permute.xlu0 0
  %355 = vperm.xlu0 %354, %v79
  %v356 = vpop.permute.xlu0 %355
  %359 = vset.pattern.permute.xlu0 0
  %360 = vperm.xlu0 %359, %v80
  %v361 = vpop.permute.xlu0 %360
  %364 = vset.pattern.permute.xlu0 0
  %365 = vperm.xlu0 %364, %v81
  %v366 = vpop.permute.xlu0 %365
  %369 = vset.pattern.permute.xlu0 0
  %370 = vperm.xlu0 %369, %v82
  %v371 = vpop.permute.xlu0 %370
  %374 = vset.pattern.permute.xlu0 0
  %375 = vperm.xlu0 %374, %v83
  %v376 = vpop.permute.xlu0 %375
  %379 = vset.pattern.permute.xlu0 0
  %380 = vperm.xlu0 %379, %v84
  %v381 = vpop.permute.xlu0 %380
  %384 = vset.pattern.permute.xlu0 0
  %385 = vperm.xlu0 %384, %v85
  %v386 = vpop.permute.xlu0 %385
  %389 = vset.pattern.permute.xlu0 0
  %390 = vperm.xlu0 %389, %v86
  %v391 = vpop.permute.xlu0 %390
  %394 = vset.pattern.permute.xlu0 0
  %395 = vperm.xlu0 %394, %v87
  %v396 = vpop.permute.xlu0 %395
  %399 = vset.pattern.permute.xlu0 0
  %400 = vperm.xlu0 %399, %v88
  %v401 = vpop.permute.xlu0 %400
  %404 = vset.pattern.permute.xlu0 0
  %405 = vperm.xlu0 %404, %v89
  %v406 = vpop.permute.xlu0 %405
  %409 = vset.pattern.permute.xlu0 0
  %410 = vperm.xlu0 %409, %v90
  %v411 = vpop.permute.xlu0 %410
  %v413 = vlaneseq
  %v414 = vshrl.u32 %v413, 7
  %v415 = vsub.s32 0, %v414
  %v416 = vrot.slane %v92, %v415
  %v417 = vmul.f32 %v96, %v416
  %v418 = vmul.f32 %v101, %v416
  %v419 = vmul.f32 %v106, %v416
  %v420 = vmul.f32 %v111, %v416
  %v421 = vmul.f32 %v116, %v416
  %v422 = vmul.f32 %v121, %v416
  %v423 = vmul.f32 %v126, %v416
  %v424 = vmul.f32 %v131, %v416
  %v425 = vmul.f32 %v136, %v416
  %v426 = vmul.f32 %v141, %v416
  %v427 = vmul.f32 %v146, %v416
  %v428 = vmul.f32 %v151, %v416
  %v429 = vmul.f32 %v156, %v416
  %v430 = vmul.f32 %v161, %v416
  %v431 = vmul.f32 %v166, %v416
  %v432 = vmul.f32 %v171, %v416
  %v433 = vmul.f32 %v176, %v416
  %v434 = vmul.f32 %v181, %v416
  %v435 = vmul.f32 %v186, %v416
  %v436 = vmul.f32 %v191, %v416
  %v437 = vmul.f32 %v196, %v416
  %v438 = vmul.f32 %v201, %v416
  %v439 = vmul.f32 %v206, %v416
  %v440 = vmul.f32 %v211, %v416
  %v441 = vmul.f32 %v216, %v416
  %v442 = vmul.f32 %v221, %v416
  %v443 = vmul.f32 %v226, %v416
  %v444 = vmul.f32 %v231, %v416
  %v445 = vmul.f32 %v236, %v416
  %v446 = vmul.f32 %v241, %v416
  %v447 = vmul.f32 %v246, %v416
  %v448 = vmul.f32 %v251, %v416
  %v449 = vmul.f32 %v256, %v416
  %v450 = vmul.f32 %v261, %v416
  %v451 = vmul.f32 %v266, %v416
  %v452 = vmul.f32 %v271, %v416
  %v453 = vmul.f32 %v276, %v416
  %v454 = vmul.f32 %v281, %v416
  %v455 = vmul.f32 %v286, %v416
  %v456 = vmul.f32 %v291, %v416
  %v457 = vmul.f32 %v296, %v416
  %v458 = vmul.f32 %v301, %v416
  %v459 = vmul.f32 %v306, %v416
  %v460 = vmul.f32 %v311, %v416
  %v461 = vmul.f32 %v316, %v416
  %v462 = vmul.f32 %v321, %v416
  %v463 = vmul.f32 %v326, %v416
  %v464 = vmul.f32 %v331, %v416
  %v465 = vmul.f32 %v336, %v416
  %v466 = vmul.f32 %v341, %v416
  %v467 = vmul.f32 %v346, %v416
  %v468 = vmul.f32 %v351, %v416
  %v469 = vmul.f32 %v356, %v416
  %v470 = vmul.f32 %v361, %v416
  %v471 = vmul.f32 %v366, %v416
  %v472 = vmul.f32 %v371, %v416
  %v473 = vmul.f32 %v376, %v416
  %v474 = vmul.f32 %v381, %v416
  %v475 = vmul.f32 %v386, %v416
  %v476 = vmul.f32 %v391, %v416
  %v477 = vmul.f32 %v396, %v416
  %v478 = vmul.f32 %v401, %v416
  %v479 = vmul.f32 %v406, %v416
  %v480 = vmul.f32 %v411, %v416
  %v482 = vlaneseq
  %v483 = vshrl.u32 %v482, 7
  %v484 = vsub.s32 0, %v483
  %v485 = vrot.slane %v91, %v484
  %v487 = vadd.f32 %v485, %v417
  %v488 = vadd.f32 %v485, %v418
  %v489 = vadd.f32 %v485, %v419
  %v490 = vadd.f32 %v485, %v420
  %v491 = vadd.f32 %v485, %v421
  %v492 = vadd.f32 %v485, %v422
  %v493 = vadd.f32 %v485, %v423
  %v494 = vadd.f32 %v485, %v424
  %v495 = vadd.f32 %v485, %v425
  %v496 = vadd.f32 %v485, %v426
  %v497 = vadd.f32 %v485, %v427
  %v498 = vadd.f32 %v485, %v428
  %v499 = vadd.f32 %v485, %v429
  %v500 = vadd.f32 %v485, %v430
  %v501 = vadd.f32 %v485, %v431
  %v502 = vadd.f32 %v485, %v432
  %v503 = vadd.f32 %v485, %v433
  %v504 = vadd.f32 %v485, %v434
  %v505 = vadd.f32 %v485, %v435
  %v506 = vadd.f32 %v485, %v436
  %v507 = vadd.f32 %v485, %v437
  %v508 = vadd.f32 %v485, %v438
  %v509 = vadd.f32 %v485, %v439
  %v510 = vadd.f32 %v485, %v440
  %v511 = vadd.f32 %v485, %v441
  %v512 = vadd.f32 %v485, %v442
  %v513 = vadd.f32 %v485, %v443
  %v514 = vadd.f32 %v485, %v444
  %v515 = vadd.f32 %v485, %v445
  %v516 = vadd.f32 %v485, %v446
  %v517 = vadd.f32 %v485, %v447
  %v518 = vadd.f32 %v485, %v448
  %v519 = vadd.f32 %v485, %v449
  %v520 = vadd.f32 %v485, %v450
  %v521 = vadd.f32 %v485, %v451
  %v522 = vadd.f32 %v485, %v452
  %v523 = vadd.f32 %v485, %v453
  %v524 = vadd.f32 %v485, %v454
  %v525 = vadd.f32 %v485, %v455
  %v526 = vadd.f32 %v485, %v456
  %v527 = vadd.f32 %v485, %v457
  %v528 = vadd.f32 %v485, %v458
  %v529 = vadd.f32 %v485, %v459
  %v530 = vadd.f32 %v485, %v460
  %v531 = vadd.f32 %v485, %v461
  %v532 = vadd.f32 %v485, %v462
  %v533 = vadd.f32 %v485, %v463
  %v534 = vadd.f32 %v485, %v464
  %v535 = vadd.f32 %v485, %v465
  %v536 = vadd.f32 %v485, %v466
  %v537 = vadd.f32 %v485, %v467
  %v538 = vadd.f32 %v485, %v468
  %v539 = vadd.f32 %v485, %v469
  %v540 = vadd.f32 %v485, %v470
  %v541 = vadd.f32 %v485, %v471
  %v542 = vadd.f32 %v485, %v472
  %v543 = vadd.f32 %v485, %v473
  %v544 = vadd.f32 %v485, %v474
  %v545 = vadd.f32 %v485, %v475
  %v546 = vadd.f32 %v485, %v476
  %v547 = vadd.f32 %v485, %v477
  %v548 = vadd.f32 %v485, %v478
  %v549 = vadd.f32 %v485, %v479
  %v550 = vadd.f32 %v485, %v480
  %v551 = vld [vmem:[%s1 + $0x1] sm:$0x1]
  %552 = vset.pattern.permute.xlu0 1
  %553 = vperm.xlu0 %552, %v27
  %v554 = vpop.permute.xlu0 %553
  %556 = vset.pattern.permute.xlu0 1
  %557 = vperm.xlu0 %556, %v28
  %v558 = vpop.permute.xlu0 %557
  %560 = vset.pattern.permute.xlu0 1
  %561 = vperm.xlu0 %560, %v29
  %v562 = vpop.permute.xlu0 %561
  %564 = vset.pattern.permute.xlu0 1
  %565 = vperm.xlu0 %564, %v30
  %v566 = vpop.permute.xlu0 %565
  %568 = vset.pattern.permute.xlu0 1
  %569 = vperm.xlu0 %568, %v31
  %v570 = vpop.permute.xlu0 %569
  %572 = vset.pattern.permute.xlu0 1
  %573 = vperm.xlu0 %572, %v32
  %v574 = vpop.permute.xlu0 %573
  %576 = vset.pattern.permute.xlu0 1
  %577 = vperm.xlu0 %576, %v33
  %v578 = vpop.permute.xlu0 %577
  %580 = vset.pattern.permute.xlu0 1
  %581 = vperm.xlu0 %580, %v34
  %v582 = vpop.permute.xlu0 %581
  %584 = vset.pattern.permute.xlu0 1
  %585 = vperm.xlu0 %584, %v35
  %v586 = vpop.permute.xlu0 %585
  %588 = vset.pattern.permute.xlu0 1
  %589 = vperm.xlu0 %588, %v36
  %v590 = vpop.permute.xlu0 %589
  %592 = vset.pattern.permute.xlu0 1
  %593 = vperm.xlu0 %592, %v37
  %v594 = vpop.permute.xlu0 %593
  %596 = vset.pattern.permute.xlu0 1
  %597 = vperm.xlu0 %596, %v38
  %v598 = vpop.permute.xlu0 %597
  %600 = vset.pattern.permute.xlu0 1
  %601 = vperm.xlu0 %600, %v39
  %v602 = vpop.permute.xlu0 %601
  %604 = vset.pattern.permute.xlu0 1
  %605 = vperm.xlu0 %604, %v40
  %v606 = vpop.permute.xlu0 %605
  %608 = vset.pattern.permute.xlu0 1
  %609 = vperm.xlu0 %608, %v41
  %v610 = vpop.permute.xlu0 %609
  %612 = vset.pattern.permute.xlu0 1
  %613 = vperm.xlu0 %612, %v42
  %v614 = vpop.permute.xlu0 %613
  %616 = vset.pattern.permute.xlu0 1
  %617 = vperm.xlu0 %616, %v43
  %v618 = vpop.permute.xlu0 %617
  %620 = vset.pattern.permute.xlu0 1
  %621 = vperm.xlu0 %620, %v44
  %v622 = vpop.permute.xlu0 %621
  %624 = vset.pattern.permute.xlu0 1
  %625 = vperm.xlu0 %624, %v45
  %v626 = vpop.permute.xlu0 %625
  %628 = vset.pattern.permute.xlu0 1
  %629 = vperm.xlu0 %628, %v46
  %v630 = vpop.permute.xlu0 %629
  %632 = vset.pattern.permute.xlu0 1
  %633 = vperm.xlu0 %632, %v47
  %v634 = vpop.permute.xlu0 %633
  %636 = vset.pattern.permute.xlu0 1
  %637 = vperm.xlu0 %636, %v48
  %v638 = vpop.permute.xlu0 %637
  %640 = vset.pattern.permute.xlu0 1
  %641 = vperm.xlu0 %640, %v49
  %v642 = vpop.permute.xlu0 %641
  %644 = vset.pattern.permute.xlu0 1
  %645 = vperm.xlu0 %644, %v50
  %v646 = vpop.permute.xlu0 %645
  %648 = vset.pattern.permute.xlu0 1
  %649 = vperm.xlu0 %648, %v51
  %v650 = vpop.permute.xlu0 %649
  %652 = vset.pattern.permute.xlu0 1
  %653 = vperm.xlu0 %652, %v52
  %v654 = vpop.permute.xlu0 %653
  %656 = vset.pattern.permute.xlu0 1
  %657 = vperm.xlu0 %656, %v53
  %v658 = vpop.permute.xlu0 %657
  %660 = vset.pattern.permute.xlu0 1
  %661 = vperm.xlu0 %660, %v54
  %v662 = vpop.permute.xlu0 %661
  %664 = vset.pattern.permute.xlu0 1
  %665 = vperm.xlu0 %664, %v55
  %v666 = vpop.permute.xlu0 %665
  %668 = vset.pattern.permute.xlu0 1
  %669 = vperm.xlu0 %668, %v56
  %v670 = vpop.permute.xlu0 %669
  %672 = vset.pattern.permute.xlu0 1
  %673 = vperm.xlu0 %672, %v57
  %v674 = vpop.permute.xlu0 %673
  %676 = vset.pattern.permute.xlu0 1
  %677 = vperm.xlu0 %676, %v58
  %v678 = vpop.permute.xlu0 %677
  %680 = vset.pattern.permute.xlu0 1
  %681 = vperm.xlu0 %680, %v59
  %v682 = vpop.permute.xlu0 %681
  %684 = vset.pattern.permute.xlu0 1
  %685 = vperm.xlu0 %684, %v60
  %v686 = vpop.permute.xlu0 %685
  %688 = vset.pattern.permute.xlu0 1
  %689 = vperm.xlu0 %688, %v61
  %v690 = vpop.permute.xlu0 %689
  %692 = vset.pattern.permute.xlu0 1
  %693 = vperm.xlu0 %692, %v62
  %v694 = vpop.permute.xlu0 %693
  %696 = vset.pattern.permute.xlu0 1
  %697 = vperm.xlu0 %696, %v63
  %v698 = vpop.permute.xlu0 %697
  %700 = vset.pattern.permute.xlu0 1
  %701 = vperm.xlu0 %700, %v64
  %v702 = vpop.permute.xlu0 %701
  %704 = vset.pattern.permute.xlu0 1
  %705 = vperm.xlu0 %704, %v65
  %v706 = vpop.permute.xlu0 %705
  %708 = vset.pattern.permute.xlu0 1
  %709 = vperm.xlu0 %708, %v66
  %v710 = vpop.permute.xlu0 %709
  %712 = vset.pattern.permute.xlu0 1
  %713 = vperm.xlu0 %712, %v67
  %v714 = vpop.permute.xlu0 %713
  %716 = vset.pattern.permute.xlu0 1
  %717 = vperm.xlu0 %716, %v68
  %v718 = vpop.permute.xlu0 %717
  %720 = vset.pattern.permute.xlu0 1
  %721 = vperm.xlu0 %720, %v69
  %v722 = vpop.permute.xlu0 %721
  %724 = vset.pattern.permute.xlu0 1
  %725 = vperm.xlu0 %724, %v70
  %v726 = vpop.permute.xlu0 %725
  %728 = vset.pattern.permute.xlu0 1
  %729 = vperm.xlu0 %728, %v71
  %v730 = vpop.permute.xlu0 %729
  %732 = vset.pattern.permute.xlu0 1
  %733 = vperm.xlu0 %732, %v72
  %v734 = vpop.permute.xlu0 %733
  %736 = vset.pattern.permute.xlu0 1
  %737 = vperm.xlu0 %736, %v73
  %v738 = vpop.permute.xlu0 %737
  %740 = vset.pattern.permute.xlu0 1
  %741 = vperm.xlu0 %740, %v74
  %v742 = vpop.permute.xlu0 %741
  %744 = vset.pattern.permute.xlu0 1
  %745 = vperm.xlu0 %744, %v75
  %v746 = vpop.permute.xlu0 %745
  %748 = vset.pattern.permute.xlu0 1
  %749 = vperm.xlu0 %748, %v76
  %v750 = vpop.permute.xlu0 %749
  %752 = vset.pattern.permute.xlu0 1
  %753 = vperm.xlu0 %752, %v77
  %v754 = vpop.permute.xlu0 %753
  %756 = vset.pattern.permute.xlu0 1
  %757 = vperm.xlu0 %756, %v78
  %v758 = vpop.permute.xlu0 %757
  %760 = vset.pattern.permute.xlu0 1
  %761 = vperm.xlu0 %760, %v79
  %v762 = vpop.permute.xlu0 %761
  %764 = vset.pattern.permute.xlu0 1
  %765 = vperm.xlu0 %764, %v80
  %v766 = vpop.permute.xlu0 %765
  %768 = vset.pattern.permute.xlu0 1
  %769 = vperm.xlu0 %768, %v81
  %v770 = vpop.permute.xlu0 %769
  %772 = vset.pattern.permute.xlu0 1
  %773 = vperm.xlu0 %772, %v82
  %v774 = vpop.permute.xlu0 %773
  %776 = vset.pattern.permute.xlu0 1
  %777 = vperm.xlu0 %776, %v83
  %v778 = vpop.permute.xlu0 %777
  %780 = vset.pattern.permute.xlu0 1
  %781 = vperm.xlu0 %780, %v84
  %v782 = vpop.permute.xlu0 %781
  %784 = vset.pattern.permute.xlu0 1
  %785 = vperm.xlu0 %784, %v85
  %v786 = vpop.permute.xlu0 %785
  %788 = vset.pattern.permute.xlu0 1
  %789 = vperm.xlu0 %788, %v86
  %v790 = vpop.permute.xlu0 %789
  %792 = vset.pattern.permute.xlu0 1
  %793 = vperm.xlu0 %792, %v87
  %v794 = vpop.permute.xlu0 %793
  %796 = vset.pattern.permute.xlu0 1
  %797 = vperm.xlu0 %796, %v88
  %v798 = vpop.permute.xlu0 %797
  %800 = vset.pattern.permute.xlu0 1
  %801 = vperm.xlu0 %800, %v89
  %v802 = vpop.permute.xlu0 %801
  %804 = vset.pattern.permute.xlu0 1
  %805 = vperm.xlu0 %804, %v90
  %v806 = vpop.permute.xlu0 %805
  %v808 = vlaneseq
  %v809 = vshrl.u32 %v808, 7
  %v810 = vsub.s32 0, %v809
  %v811 = vrot.slane %v551, %v810
  %v812 = vmul.f32 %v554, %v811
  %v813 = vmul.f32 %v558, %v811
  %v814 = vmul.f32 %v562, %v811
  %v815 = vmul.f32 %v566, %v811
  %v816 = vmul.f32 %v570, %v811
  %v817 = vmul.f32 %v574, %v811
  %v818 = vmul.f32 %v578, %v811
  %v819 = vmul.f32 %v582, %v811
  %v820 = vmul.f32 %v586, %v811
  %v821 = vmul.f32 %v590, %v811
  %v822 = vmul.f32 %v594, %v811
  %v823 = vmul.f32 %v598, %v811
  %v824 = vmul.f32 %v602, %v811
  %v825 = vmul.f32 %v606, %v811
  %v826 = vmul.f32 %v610, %v811
  %v827 = vmul.f32 %v614, %v811
  %v828 = vmul.f32 %v618, %v811
  %v829 = vmul.f32 %v622, %v811
  %v830 = vmul.f32 %v626, %v811
  %v831 = vmul.f32 %v630, %v811
  %v832 = vmul.f32 %v634, %v811
  %v833 = vmul.f32 %v638, %v811
  %v834 = vmul.f32 %v642, %v811
  %v835 = vmul.f32 %v646, %v811
  %v836 = vmul.f32 %v650, %v811
  %v837 = vmul.f32 %v654, %v811
  %v838 = vmul.f32 %v658, %v811
  %v839 = vmul.f32 %v662, %v811
  %v840 = vmul.f32 %v666, %v811
  %v841 = vmul.f32 %v670, %v811
  %v842 = vmul.f32 %v674, %v811
  %v843 = vmul.f32 %v678, %v811
  %v844 = vmul.f32 %v682, %v811
  %v845 = vmul.f32 %v686, %v811
  %v846 = vmul.f32 %v690, %v811
  %v847 = vmul.f32 %v694, %v811
  %v848 = vmul.f32 %v698, %v811
  %v849 = vmul.f32 %v702, %v811
  %v850 = vmul.f32 %v706, %v811
  %v851 = vmul.f32 %v710, %v811
  %v852 = vmul.f32 %v714, %v811
  %v853 = vmul.f32 %v718, %v811
  %v854 = vmul.f32 %v722, %v811
  %v855 = vmul.f32 %v726, %v811
  %v856 = vmul.f32 %v730, %v811
  %v857 = vmul.f32 %v734, %v811
  %v858 = vmul.f32 %v738, %v811
  %v859 = vmul.f32 %v742, %v811
  %v860 = vmul.f32 %v746, %v811
  %v861 = vmul.f32 %v750, %v811
  %v862 = vmul.f32 %v754, %v811
  %v863 = vmul.f32 %v758, %v811
  %v864 = vmul.f32 %v762, %v811
  %v865 = vmul.f32 %v766, %v811
  %v866 = vmul.f32 %v770, %v811
  %v867 = vmul.f32 %v774, %v811
  %v868 = vmul.f32 %v778, %v811
  %v869 = vmul.f32 %v782, %v811
  %v870 = vmul.f32 %v786, %v811
  %v871 = vmul.f32 %v790, %v811
  %v872 = vmul.f32 %v794, %v811
  %v873 = vmul.f32 %v798, %v811
  %v874 = vmul.f32 %v802, %v811
  %v875 = vmul.f32 %v806, %v811
  %v876 = vadd.f32 %v487, %v812
  %v877 = vadd.f32 %v488, %v813
  %v878 = vadd.f32 %v489, %v814
  %v879 = vadd.f32 %v490, %v815
  %v880 = vadd.f32 %v491, %v816
  %v881 = vadd.f32 %v492, %v817
  %v882 = vadd.f32 %v493, %v818
  %v883 = vadd.f32 %v494, %v819
  %v884 = vadd.f32 %v495, %v820
  %v885 = vadd.f32 %v496, %v821
  %v886 = vadd.f32 %v497, %v822
  %v887 = vadd.f32 %v498, %v823
  %v888 = vadd.f32 %v499, %v824
  %v889 = vadd.f32 %v500, %v825
  %v890 = vadd.f32 %v501, %v826
  %v891 = vadd.f32 %v502, %v827
  %v892 = vadd.f32 %v503, %v828
  %v893 = vadd.f32 %v504, %v829
  %v894 = vadd.f32 %v505, %v830
  %v895 = vadd.f32 %v506, %v831
  %v896 = vadd.f32 %v507, %v832
  %v897 = vadd.f32 %v508, %v833
  %v898 = vadd.f32 %v509, %v834
  %v899 = vadd.f32 %v510, %v835
  %v900 = vadd.f32 %v511, %v836
  %v901 = vadd.f32 %v512, %v837
  %v902 = vadd.f32 %v513, %v838
  %v903 = vadd.f32 %v514, %v839
  %v904 = vadd.f32 %v515, %v840
  %v905 = vadd.f32 %v516, %v841
  %v906 = vadd.f32 %v517, %v842
  %v907 = vadd.f32 %v518, %v843
  %v908 = vadd.f32 %v519, %v844
  %v909 = vadd.f32 %v520, %v845
  %v910 = vadd.f32 %v521, %v846
  %v911 = vadd.f32 %v522, %v847
  %v912 = vadd.f32 %v523, %v848
  %v913 = vadd.f32 %v524, %v849
  %v914 = vadd.f32 %v525, %v850
  %v915 = vadd.f32 %v526, %v851
  %v916 = vadd.f32 %v527, %v852
  %v917 = vadd.f32 %v528, %v853
  %v918 = vadd.f32 %v529, %v854
  %v919 = vadd.f32 %v530, %v855
  %v920 = vadd.f32 %v531, %v856
  %v921 = vadd.f32 %v532, %v857
  %v922 = vadd.f32 %v533, %v858
  %v923 = vadd.f32 %v534, %v859
  %v924 = vadd.f32 %v535, %v860
  %v925 = vadd.f32 %v536, %v861
  %v926 = vadd.f32 %v537, %v862
  %v927 = vadd.f32 %v538, %v863
  %v928 = vadd.f32 %v539, %v864
  %v929 = vadd.f32 %v540, %v865
  %v930 = vadd.f32 %v541, %v866
  %v931 = vadd.f32 %v542, %v867
  %v932 = vadd.f32 %v543, %v868
  %v933 = vadd.f32 %v544, %v869
  %v934 = vadd.f32 %v545, %v870
  %v935 = vadd.f32 %v546, %v871
  %v936 = vadd.f32 %v547, %v872
  %v937 = vadd.f32 %v548, %v873
  %v938 = vadd.f32 %v549, %v874
  %v939 = vadd.f32 %v550, %v875
  %v940 = vld [vmem:[%s1 + $0x2] sm:$0x1]
  %941 = vset.pattern.permute.xlu0 2
  %942 = vperm.xlu0 %941, %v27
  %v943 = vpop.permute.xlu0 %942
  %945 = vset.pattern.permute.xlu0 2
  %946 = vperm.xlu0 %945, %v28
  %v947 = vpop.permute.xlu0 %946
  %949 = vset.pattern.permute.xlu0 2
  %950 = vperm.xlu0 %949, %v29
  %v951 = vpop.permute.xlu0 %950
  %953 = vset.pattern.permute.xlu0 2
  %954 = vperm.xlu0 %953, %v30
  %v955 = vpop.permute.xlu0 %954
  %957 = vset.pattern.permute.xlu0 2
  %958 = vperm.xlu0 %957, %v31
  %v959 = vpop.permute.xlu0 %958
  %961 = vset.pattern.permute.xlu0 2
  %962 = vperm.xlu0 %961, %v32
  %v963 = vpop.permute.xlu0 %962
  %965 = vset.pattern.permute.xlu0 2
  %966 = vperm.xlu0 %965, %v33
  %v967 = vpop.permute.xlu0 %966
  %969 = vset.pattern.permute.xlu0 2
  %970 = vperm.xlu0 %969, %v34
  %v971 = vpop.permute.xlu0 %970
  %973 = vset.pattern.permute.xlu0 2
  %974 = vperm.xlu0 %973, %v35
  %v975 = vpop.permute.xlu0 %974
  %977 = vset.pattern.permute.xlu0 2
  %978 = vperm.xlu0 %977, %v36
  %v979 = vpop.permute.xlu0 %978
  %981 = vset.pattern.permute.xlu0 2
  %982 = vperm.xlu0 %981, %v37
  %v983 = vpop.permute.xlu0 %982
  %985 = vset.pattern.permute.xlu0 2
  %986 = vperm.xlu0 %985, %v38
  %v987 = vpop.permute.xlu0 %986
  %989 = vset.pattern.permute.xlu0 2
  %990 = vperm.xlu0 %989, %v39
  %v991 = vpop.permute.xlu0 %990
  %993 = vset.pattern.permute.xlu0 2
  %994 = vperm.xlu0 %993, %v40
  %v995 = vpop.permute.xlu0 %994
  %997 = vset.pattern.permute.xlu0 2
  %998 = vperm.xlu0 %997, %v41
  %v999 = vpop.permute.xlu0 %998
  %1001 = vset.pattern.permute.xlu0 2
  %1002 = vperm.xlu0 %1001, %v42
  %v1003 = vpop.permute.xlu0 %1002
  %1005 = vset.pattern.permute.xlu0 2
  %1006 = vperm.xlu0 %1005, %v43
  %v1007 = vpop.permute.xlu0 %1006
  %1009 = vset.pattern.permute.xlu0 2
  %1010 = vperm.xlu0 %1009, %v44
  %v1011 = vpop.permute.xlu0 %1010
  %1013 = vset.pattern.permute.xlu0 2
  %1014 = vperm.xlu0 %1013, %v45
  %v1015 = vpop.permute.xlu0 %1014
  %1017 = vset.pattern.permute.xlu0 2
  %1018 = vperm.xlu0 %1017, %v46
  %v1019 = vpop.permute.xlu0 %1018
  %1021 = vset.pattern.permute.xlu0 2
  %1022 = vperm.xlu0 %1021, %v47
  %v1023 = vpop.permute.xlu0 %1022
  %1025 = vset.pattern.permute.xlu0 2
  %1026 = vperm.xlu0 %1025, %v48
  %v1027 = vpop.permute.xlu0 %1026
  %1029 = vset.pattern.permute.xlu0 2
  %1030 = vperm.xlu0 %1029, %v49
  %v1031 = vpop.permute.xlu0 %1030
  %1033 = vset.pattern.permute.xlu0 2
  %1034 = vperm.xlu0 %1033, %v50
  %v1035 = vpop.permute.xlu0 %1034
  %1037 = vset.pattern.permute.xlu0 2
  %1038 = vperm.xlu0 %1037, %v51
  %v1039 = vpop.permute.xlu0 %1038
  %1041 = vset.pattern.permute.xlu0 2
  %1042 = vperm.xlu0 %1041, %v52
  %v1043 = vpop.permute.xlu0 %1042
  %1045 = vset.pattern.permute.xlu0 2
  %1046 = vperm.xlu0 %1045, %v53
  %v1047 = vpop.permute.xlu0 %1046
  %1049 = vset.pattern.permute.xlu0 2
  %1050 = vperm.xlu0 %1049, %v54
  %v1051 = vpop.permute.xlu0 %1050
  %1053 = vset.pattern.permute.xlu0 2
  %1054 = vperm.xlu0 %1053, %v55
  %v1055 = vpop.permute.xlu0 %1054
  %1057 = vset.pattern.permute.xlu0 2
  %1058 = vperm.xlu0 %1057, %v56
  %v1059 = vpop.permute.xlu0 %1058
  %1061 = vset.pattern.permute.xlu0 2
  %1062 = vperm.xlu0 %1061, %v57
  %v1063 = vpop.permute.xlu0 %1062
  %1065 = vset.pattern.permute.xlu0 2
  %1066 = vperm.xlu0 %1065, %v58
  %v1067 = vpop.permute.xlu0 %1066
  %1069 = vset.pattern.permute.xlu0 2
  %1070 = vperm.xlu0 %1069, %v59
  %v1071 = vpop.permute.xlu0 %1070
  %1073 = vset.pattern.permute.xlu0 2
  %1074 = vperm.xlu0 %1073, %v60
  %v1075 = vpop.permute.xlu0 %1074
  %1077 = vset.pattern.permute.xlu0 2
  %1078 = vperm.xlu0 %1077, %v61
  %v1079 = vpop.permute.xlu0 %1078
  %1081 = vset.pattern.permute.xlu0 2
  %1082 = vperm.xlu0 %1081, %v62
  %v1083 = vpop.permute.xlu0 %1082
  %1085 = vset.pattern.permute.xlu0 2
  %1086 = vperm.xlu0 %1085, %v63
  %v1087 = vpop.permute.xlu0 %1086
  %1089 = vset.pattern.permute.xlu0 2
  %1090 = vperm.xlu0 %1089, %v64
  %v1091 = vpop.permute.xlu0 %1090
  %1093 = vset.pattern.permute.xlu0 2
  %1094 = vperm.xlu0 %1093, %v65
  %v1095 = vpop.permute.xlu0 %1094
  %1097 = vset.pattern.permute.xlu0 2
  %1098 = vperm.xlu0 %1097, %v66
  %v1099 = vpop.permute.xlu0 %1098
  %1101 = vset.pattern.permute.xlu0 2
  %1102 = vperm.xlu0 %1101, %v67
  %v1103 = vpop.permute.xlu0 %1102
  %1105 = vset.pattern.permute.xlu0 2
  %1106 = vperm.xlu0 %1105, %v68
  %v1107 = vpop.permute.xlu0 %1106
  %1109 = vset.pattern.permute.xlu0 2
  %1110 = vperm.xlu0 %1109, %v69
  %v1111 = vpop.permute.xlu0 %1110
  %1113 = vset.pattern.permute.xlu0 2
  %1114 = vperm.xlu0 %1113, %v70
  %v1115 = vpop.permute.xlu0 %1114
  %1117 = vset.pattern.permute.xlu0 2
  %1118 = vperm.xlu0 %1117, %v71
  %v1119 = vpop.permute.xlu0 %1118
  %1121 = vset.pattern.permute.xlu0 2
  %1122 = vperm.xlu0 %1121, %v72
  %v1123 = vpop.permute.xlu0 %1122
  %1125 = vset.pattern.permute.xlu0 2
  %1126 = vperm.xlu0 %1125, %v73
  %v1127 = vpop.permute.xlu0 %1126
  %1129 = vset.pattern.permute.xlu0 2
  %1130 = vperm.xlu0 %1129, %v74
  %v1131 = vpop.permute.xlu0 %1130
  %1133 = vset.pattern.permute.xlu0 2
  %1134 = vperm.xlu0 %1133, %v75
  %v1135 = vpop.permute.xlu0 %1134
  %1137 = vset.pattern.permute.xlu0 2
  %1138 = vperm.xlu0 %1137, %v76
  %v1139 = vpop.permute.xlu0 %1138
  %1141 = vset.pattern.permute.xlu0 2
  %1142 = vperm.xlu0 %1141, %v77
  %v1143 = vpop.permute.xlu0 %1142
  %1145 = vset.pattern.permute.xlu0 2
  %1146 = vperm.xlu0 %1145, %v78
  %v1147 = vpop.permute.xlu0 %1146
  %1149 = vset.pattern.permute.xlu0 2
  %1150 = vperm.xlu0 %1149, %v79
  %v1151 = vpop.permute.xlu0 %1150
  %1153 = vset.pattern.permute.xlu0 2
  %1154 = vperm.xlu0 %1153, %v80
  %v1155 = vpop.permute.xlu0 %1154
  %1157 = vset.pattern.permute.xlu0 2
  %1158 = vperm.xlu0 %1157, %v81
  %v1159 = vpop.permute.xlu0 %1158
  %1161 = vset.pattern.permute.xlu0 2
  %1162 = vperm.xlu0 %1161, %v82
  %v1163 = vpop.permute.xlu0 %1162
  %1165 = vset.pattern.permute.xlu0 2
  %1166 = vperm.xlu0 %1165, %v83
  %v1167 = vpop.permute.xlu0 %1166
  %1169 = vset.pattern.permute.xlu0 2
  %1170 = vperm.xlu0 %1169, %v84
  %v1171 = vpop.permute.xlu0 %1170
  %1173 = vset.pattern.permute.xlu0 2
  %1174 = vperm.xlu0 %1173, %v85
  %v1175 = vpop.permute.xlu0 %1174
  %1177 = vset.pattern.permute.xlu0 2
  %1178 = vperm.xlu0 %1177, %v86
  %v1179 = vpop.permute.xlu0 %1178
  %1181 = vset.pattern.permute.xlu0 2
  %1182 = vperm.xlu0 %1181, %v87
  %v1183 = vpop.permute.xlu0 %1182
  %1185 = vset.pattern.permute.xlu0 2
  %1186 = vperm.xlu0 %1185, %v88
  %v1187 = vpop.permute.xlu0 %1186
  %1189 = vset.pattern.permute.xlu0 2
  %1190 = vperm.xlu0 %1189, %v89
  %v1191 = vpop.permute.xlu0 %1190
  %1193 = vset.pattern.permute.xlu0 2
  %1194 = vperm.xlu0 %1193, %v90
  %v1195 = vpop.permute.xlu0 %1194
  %v1197 = vlaneseq
  %v1198 = vshrl.u32 %v1197, 7
  %v1199 = vsub.s32 0, %v1198
  %v1200 = vrot.slane %v940, %v1199
  %v1201 = vmul.f32 %v943, %v1200
  %v1202 = vmul.f32 %v947, %v1200
  %v1203 = vmul.f32 %v951, %v1200
  %v1204 = vmul.f32 %v955, %v1200
  %v1205 = vmul.f32 %v959, %v1200
  %v1206 = vmul.f32 %v963, %v1200
  %v1207 = vmul.f32 %v967, %v1200
  %v1208 = vmul.f32 %v971, %v1200
  %v1209 = vmul.f32 %v975, %v1200
  %v1210 = vmul.f32 %v979, %v1200
  %v1211 = vmul.f32 %v983, %v1200
  %v1212 = vmul.f32 %v987, %v1200
  %v1213 = vmul.f32 %v991, %v1200
  %v1214 = vmul.f32 %v995, %v1200
  %v1215 = vmul.f32 %v999, %v1200
  %v1216 = vmul.f32 %v1003, %v1200
  %v1217 = vmul.f32 %v1007, %v1200
  %v1218 = vmul.f32 %v1011, %v1200
  %v1219 = vmul.f32 %v1015, %v1200
  %v1220 = vmul.f32 %v1019, %v1200
  %v1221 = vmul.f32 %v1023, %v1200
  %v1222 = vmul.f32 %v1027, %v1200
  %v1223 = vmul.f32 %v1031, %v1200
  %v1224 = vmul.f32 %v1035, %v1200
  %v1225 = vmul.f32 %v1039, %v1200
  %v1226 = vmul.f32 %v1043, %v1200
  %v1227 = vmul.f32 %v1047, %v1200
  %v1228 = vmul.f32 %v1051, %v1200
  %v1229 = vmul.f32 %v1055, %v1200
  %v1230 = vmul.f32 %v1059, %v1200
  %v1231 = vmul.f32 %v1063, %v1200
  %v1232 = vmul.f32 %v1067, %v1200
  %v1233 = vmul.f32 %v1071, %v1200
  %v1234 = vmul.f32 %v1075, %v1200
  %v1235 = vmul.f32 %v1079, %v1200
  %v1236 = vmul.f32 %v1083, %v1200
  %v1237 = vmul.f32 %v1087, %v1200
  %v1238 = vmul.f32 %v1091, %v1200
  %v1239 = vmul.f32 %v1095, %v1200
  %v1240 = vmul.f32 %v1099, %v1200
  %v1241 = vmul.f32 %v1103, %v1200
  %v1242 = vmul.f32 %v1107, %v1200
  %v1243 = vmul.f32 %v1111, %v1200
  %v1244 = vmul.f32 %v1115, %v1200
  %v1245 = vmul.f32 %v1119, %v1200
  %v1246 = vmul.f32 %v1123, %v1200
  %v1247 = vmul.f32 %v1127, %v1200
  %v1248 = vmul.f32 %v1131, %v1200
  %v1249 = vmul.f32 %v1135, %v1200
  %v1250 = vmul.f32 %v1139, %v1200
  %v1251 = vmul.f32 %v1143, %v1200
  %v1252 = vmul.f32 %v1147, %v1200
  %v1253 = vmul.f32 %v1151, %v1200
  %v1254 = vmul.f32 %v1155, %v1200
  %v1255 = vmul.f32 %v1159, %v1200
  %v1256 = vmul.f32 %v1163, %v1200
  %v1257 = vmul.f32 %v1167, %v1200
  %v1258 = vmul.f32 %v1171, %v1200
  %v1259 = vmul.f32 %v1175, %v1200
  %v1260 = vmul.f32 %v1179, %v1200
  %v1261 = vmul.f32 %v1183, %v1200
  %v1262 = vmul.f32 %v1187, %v1200
  %v1263 = vmul.f32 %v1191, %v1200
  %v1264 = vmul.f32 %v1195, %v1200
  %v1265 = vadd.f32 %v876, %v1201
  %v1266 = vadd.f32 %v877, %v1202
  %v1267 = vadd.f32 %v878, %v1203
  %v1268 = vadd.f32 %v879, %v1204
  %v1269 = vadd.f32 %v880, %v1205
  %v1270 = vadd.f32 %v881, %v1206
  %v1271 = vadd.f32 %v882, %v1207
  %v1272 = vadd.f32 %v883, %v1208
  %v1273 = vadd.f32 %v884, %v1209
  %v1274 = vadd.f32 %v885, %v1210
  %v1275 = vadd.f32 %v886, %v1211
  %v1276 = vadd.f32 %v887, %v1212
  %v1277 = vadd.f32 %v888, %v1213
  %v1278 = vadd.f32 %v889, %v1214
  %v1279 = vadd.f32 %v890, %v1215
  %v1280 = vadd.f32 %v891, %v1216
  %v1281 = vadd.f32 %v892, %v1217
  %v1282 = vadd.f32 %v893, %v1218
  %v1283 = vadd.f32 %v894, %v1219
  %v1284 = vadd.f32 %v895, %v1220
  %v1285 = vadd.f32 %v896, %v1221
  %v1286 = vadd.f32 %v897, %v1222
  %v1287 = vadd.f32 %v898, %v1223
  %v1288 = vadd.f32 %v899, %v1224
  %v1289 = vadd.f32 %v900, %v1225
  %v1290 = vadd.f32 %v901, %v1226
  %v1291 = vadd.f32 %v902, %v1227
  %v1292 = vadd.f32 %v903, %v1228
  %v1293 = vadd.f32 %v904, %v1229
  %v1294 = vadd.f32 %v905, %v1230
  %v1295 = vadd.f32 %v906, %v1231
  %v1296 = vadd.f32 %v907, %v1232
  %v1297 = vadd.f32 %v908, %v1233
  %v1298 = vadd.f32 %v909, %v1234
  %v1299 = vadd.f32 %v910, %v1235
  %v1300 = vadd.f32 %v911, %v1236
  %v1301 = vadd.f32 %v912, %v1237
  %v1302 = vadd.f32 %v913, %v1238
  %v1303 = vadd.f32 %v914, %v1239
  %v1304 = vadd.f32 %v915, %v1240
  %v1305 = vadd.f32 %v916, %v1241
  %v1306 = vadd.f32 %v917, %v1242
  %v1307 = vadd.f32 %v918, %v1243
  %v1308 = vadd.f32 %v919, %v1244
  %v1309 = vadd.f32 %v920, %v1245
  %v1310 = vadd.f32 %v921, %v1246
  %v1311 = vadd.f32 %v922, %v1247
  %v1312 = vadd.f32 %v923, %v1248
  %v1313 = vadd.f32 %v924, %v1249
  %v1314 = vadd.f32 %v925, %v1250
  %v1315 = vadd.f32 %v926, %v1251
  %v1316 = vadd.f32 %v927, %v1252
  %v1317 = vadd.f32 %v928, %v1253
  %v1318 = vadd.f32 %v929, %v1254
  %v1319 = vadd.f32 %v930, %v1255
  %v1320 = vadd.f32 %v931, %v1256
  %v1321 = vadd.f32 %v932, %v1257
  %v1322 = vadd.f32 %v933, %v1258
  %v1323 = vadd.f32 %v934, %v1259
  %v1324 = vadd.f32 %v935, %v1260
  %v1325 = vadd.f32 %v936, %v1261
  %v1326 = vadd.f32 %v937, %v1262
  %v1327 = vadd.f32 %v938, %v1263
  %v1328 = vadd.f32 %v939, %v1264
  %v1329 = vld [vmem:[%s1 + $0x3] sm:$0x1]
  %1330 = vset.pattern.permute.xlu0 3
  %1331 = vperm.xlu0 %1330, %v27
  %v1332 = vpop.permute.xlu0 %1331
  %1334 = vset.pattern.permute.xlu0 3
  %1335 = vperm.xlu0 %1334, %v28
  %v1336 = vpop.permute.xlu0 %1335
  %1338 = vset.pattern.permute.xlu0 3
  %1339 = vperm.xlu0 %1338, %v29
  %v1340 = vpop.permute.xlu0 %1339
  %1342 = vset.pattern.permute.xlu0 3
  %1343 = vperm.xlu0 %1342, %v30
  %v1344 = vpop.permute.xlu0 %1343
  %1346 = vset.pattern.permute.xlu0 3
  %1347 = vperm.xlu0 %1346, %v31
  %v1348 = vpop.permute.xlu0 %1347
  %1350 = vset.pattern.permute.xlu0 3
  %1351 = vperm.xlu0 %1350, %v32
  %v1352 = vpop.permute.xlu0 %1351
  %1354 = vset.pattern.permute.xlu0 3
  %1355 = vperm.xlu0 %1354, %v33
  %v1356 = vpop.permute.xlu0 %1355
  %1358 = vset.pattern.permute.xlu0 3
  %1359 = vperm.xlu0 %1358, %v34
  %v1360 = vpop.permute.xlu0 %1359
  %1362 = vset.pattern.permute.xlu0 3
  %1363 = vperm.xlu0 %1362, %v35
  %v1364 = vpop.permute.xlu0 %1363
  %1366 = vset.pattern.permute.xlu0 3
  %1367 = vperm.xlu0 %1366, %v36
  %v1368 = vpop.permute.xlu0 %1367
  %1370 = vset.pattern.permute.xlu0 3
  %1371 = vperm.xlu0 %1370, %v37
  %v1372 = vpop.permute.xlu0 %1371
  %1374 = vset.pattern.permute.xlu0 3
  %1375 = vperm.xlu0 %1374, %v38
  %v1376 = vpop.permute.xlu0 %1375
  %1378 = vset.pattern.permute.xlu0 3
  %1379 = vperm.xlu0 %1378, %v39
  %v1380 = vpop.permute.xlu0 %1379
  %1382 = vset.pattern.permute.xlu0 3
  %1383 = vperm.xlu0 %1382, %v40
  %v1384 = vpop.permute.xlu0 %1383
  %1386 = vset.pattern.permute.xlu0 3
  %1387 = vperm.xlu0 %1386, %v41
  %v1388 = vpop.permute.xlu0 %1387
  %1390 = vset.pattern.permute.xlu0 3
  %1391 = vperm.xlu0 %1390, %v42
  %v1392 = vpop.permute.xlu0 %1391
  %1394 = vset.pattern.permute.xlu0 3
  %1395 = vperm.xlu0 %1394, %v43
  %v1396 = vpop.permute.xlu0 %1395
  %1398 = vset.pattern.permute.xlu0 3
  %1399 = vperm.xlu0 %1398, %v44
  %v1400 = vpop.permute.xlu0 %1399
  %1402 = vset.pattern.permute.xlu0 3
  %1403 = vperm.xlu0 %1402, %v45
  %v1404 = vpop.permute.xlu0 %1403
  %1406 = vset.pattern.permute.xlu0 3
  %1407 = vperm.xlu0 %1406, %v46
  %v1408 = vpop.permute.xlu0 %1407
  %1410 = vset.pattern.permute.xlu0 3
  %1411 = vperm.xlu0 %1410, %v47
  %v1412 = vpop.permute.xlu0 %1411
  %1414 = vset.pattern.permute.xlu0 3
  %1415 = vperm.xlu0 %1414, %v48
  %v1416 = vpop.permute.xlu0 %1415
  %1418 = vset.pattern.permute.xlu0 3
  %1419 = vperm.xlu0 %1418, %v49
  %v1420 = vpop.permute.xlu0 %1419
  %1422 = vset.pattern.permute.xlu0 3
  %1423 = vperm.xlu0 %1422, %v50
  %v1424 = vpop.permute.xlu0 %1423
  %1426 = vset.pattern.permute.xlu0 3
  %1427 = vperm.xlu0 %1426, %v51
  %v1428 = vpop.permute.xlu0 %1427
  %1430 = vset.pattern.permute.xlu0 3
  %1431 = vperm.xlu0 %1430, %v52
  %v1432 = vpop.permute.xlu0 %1431
  %1434 = vset.pattern.permute.xlu0 3
  %1435 = vperm.xlu0 %1434, %v53
  %v1436 = vpop.permute.xlu0 %1435
  %1438 = vset.pattern.permute.xlu0 3
  %1439 = vperm.xlu0 %1438, %v54
  %v1440 = vpop.permute.xlu0 %1439
  %1442 = vset.pattern.permute.xlu0 3
  %1443 = vperm.xlu0 %1442, %v55
  %v1444 = vpop.permute.xlu0 %1443
  %1446 = vset.pattern.permute.xlu0 3
  %1447 = vperm.xlu0 %1446, %v56
  %v1448 = vpop.permute.xlu0 %1447
  %1450 = vset.pattern.permute.xlu0 3
  %1451 = vperm.xlu0 %1450, %v57
  %v1452 = vpop.permute.xlu0 %1451
  %1454 = vset.pattern.permute.xlu0 3
  %1455 = vperm.xlu0 %1454, %v58
  %v1456 = vpop.permute.xlu0 %1455
  %1458 = vset.pattern.permute.xlu0 3
  %1459 = vperm.xlu0 %1458, %v59
  %v1460 = vpop.permute.xlu0 %1459
  %1462 = vset.pattern.permute.xlu0 3
  %1463 = vperm.xlu0 %1462, %v60
  %v1464 = vpop.permute.xlu0 %1463
  %1466 = vset.pattern.permute.xlu0 3
  %1467 = vperm.xlu0 %1466, %v61
  %v1468 = vpop.permute.xlu0 %1467
  %1470 = vset.pattern.permute.xlu0 3
  %1471 = vperm.xlu0 %1470, %v62
  %v1472 = vpop.permute.xlu0 %1471
  %1474 = vset.pattern.permute.xlu0 3
  %1475 = vperm.xlu0 %1474, %v63
  %v1476 = vpop.permute.xlu0 %1475
  %1478 = vset.pattern.permute.xlu0 3
  %1479 = vperm.xlu0 %1478, %v64
  %v1480 = vpop.permute.xlu0 %1479
  %1482 = vset.pattern.permute.xlu0 3
  %1483 = vperm.xlu0 %1482, %v65
  %v1484 = vpop.permute.xlu0 %1483
  %1486 = vset.pattern.permute.xlu0 3
  %1487 = vperm.xlu0 %1486, %v66
  %v1488 = vpop.permute.xlu0 %1487
  %1490 = vset.pattern.permute.xlu0 3
  %1491 = vperm.xlu0 %1490, %v67
  %v1492 = vpop.permute.xlu0 %1491
  %1494 = vset.pattern.permute.xlu0 3
  %1495 = vperm.xlu0 %1494, %v68
  %v1496 = vpop.permute.xlu0 %1495
  %1498 = vset.pattern.permute.xlu0 3
  %1499 = vperm.xlu0 %1498, %v69
  %v1500 = vpop.permute.xlu0 %1499
  %1502 = vset.pattern.permute.xlu0 3
  %1503 = vperm.xlu0 %1502, %v70
  %v1504 = vpop.permute.xlu0 %1503
  %1506 = vset.pattern.permute.xlu0 3
  %1507 = vperm.xlu0 %1506, %v71
  %v1508 = vpop.permute.xlu0 %1507
  %1510 = vset.pattern.permute.xlu0 3
  %1511 = vperm.xlu0 %1510, %v72
  %v1512 = vpop.permute.xlu0 %1511
  %1514 = vset.pattern.permute.xlu0 3
  %1515 = vperm.xlu0 %1514, %v73
  %v1516 = vpop.permute.xlu0 %1515
  %1518 = vset.pattern.permute.xlu0 3
  %1519 = vperm.xlu0 %1518, %v74
  %v1520 = vpop.permute.xlu0 %1519
  %1522 = vset.pattern.permute.xlu0 3
  %1523 = vperm.xlu0 %1522, %v75
  %v1524 = vpop.permute.xlu0 %1523
  %1526 = vset.pattern.permute.xlu0 3
  %1527 = vperm.xlu0 %1526, %v76
  %v1528 = vpop.permute.xlu0 %1527
  %1530 = vset.pattern.permute.xlu0 3
  %1531 = vperm.xlu0 %1530, %v77
  %v1532 = vpop.permute.xlu0 %1531
  %1534 = vset.pattern.permute.xlu0 3
  %1535 = vperm.xlu0 %1534, %v78
  %v1536 = vpop.permute.xlu0 %1535
  %1538 = vset.pattern.permute.xlu0 3
  %1539 = vperm.xlu0 %1538, %v79
  %v1540 = vpop.permute.xlu0 %1539
  %1542 = vset.pattern.permute.xlu0 3
  %1543 = vperm.xlu0 %1542, %v80
  %v1544 = vpop.permute.xlu0 %1543
  %1546 = vset.pattern.permute.xlu0 3
  %1547 = vperm.xlu0 %1546, %v81
  %v1548 = vpop.permute.xlu0 %1547
  %1550 = vset.pattern.permute.xlu0 3
  %1551 = vperm.xlu0 %1550, %v82
  %v1552 = vpop.permute.xlu0 %1551
  %1554 = vset.pattern.permute.xlu0 3
  %1555 = vperm.xlu0 %1554, %v83
  %v1556 = vpop.permute.xlu0 %1555
  %1558 = vset.pattern.permute.xlu0 3
  %1559 = vperm.xlu0 %1558, %v84
  %v1560 = vpop.permute.xlu0 %1559
  %1562 = vset.pattern.permute.xlu0 3
  %1563 = vperm.xlu0 %1562, %v85
  %v1564 = vpop.permute.xlu0 %1563
  %1566 = vset.pattern.permute.xlu0 3
  %1567 = vperm.xlu0 %1566, %v86
  %v1568 = vpop.permute.xlu0 %1567
  %1570 = vset.pattern.permute.xlu0 3
  %1571 = vperm.xlu0 %1570, %v87
  %v1572 = vpop.permute.xlu0 %1571
  %1574 = vset.pattern.permute.xlu0 3
  %1575 = vperm.xlu0 %1574, %v88
  %v1576 = vpop.permute.xlu0 %1575
  %1578 = vset.pattern.permute.xlu0 3
  %1579 = vperm.xlu0 %1578, %v89
  %v1580 = vpop.permute.xlu0 %1579
  %1582 = vset.pattern.permute.xlu0 3
  %1583 = vperm.xlu0 %1582, %v90
  %v1584 = vpop.permute.xlu0 %1583
  %v1586 = vlaneseq
  %v1587 = vshrl.u32 %v1586, 7
  %v1588 = vsub.s32 0, %v1587
  %v1589 = vrot.slane %v1329, %v1588
  %v1590 = vmul.f32 %v1332, %v1589
  %v1591 = vmul.f32 %v1336, %v1589
  %v1592 = vmul.f32 %v1340, %v1589
  %v1593 = vmul.f32 %v1344, %v1589
  %v1594 = vmul.f32 %v1348, %v1589
  %v1595 = vmul.f32 %v1352, %v1589
  %v1596 = vmul.f32 %v1356, %v1589
  %v1597 = vmul.f32 %v1360, %v1589
  %v1598 = vmul.f32 %v1364, %v1589
  %v1599 = vmul.f32 %v1368, %v1589
  %v1600 = vmul.f32 %v1372, %v1589
  %v1601 = vmul.f32 %v1376, %v1589
  %v1602 = vmul.f32 %v1380, %v1589
  %v1603 = vmul.f32 %v1384, %v1589
  %v1604 = vmul.f32 %v1388, %v1589
  %v1605 = vmul.f32 %v1392, %v1589
  %v1606 = vmul.f32 %v1396, %v1589
  %v1607 = vmul.f32 %v1400, %v1589
  %v1608 = vmul.f32 %v1404, %v1589
  %v1609 = vmul.f32 %v1408, %v1589
  %v1610 = vmul.f32 %v1412, %v1589
  %v1611 = vmul.f32 %v1416, %v1589
  %v1612 = vmul.f32 %v1420, %v1589
  %v1613 = vmul.f32 %v1424, %v1589
  %v1614 = vmul.f32 %v1428, %v1589
  %v1615 = vmul.f32 %v1432, %v1589
  %v1616 = vmul.f32 %v1436, %v1589
  %v1617 = vmul.f32 %v1440, %v1589
  %v1618 = vmul.f32 %v1444, %v1589
  %v1619 = vmul.f32 %v1448, %v1589
  %v1620 = vmul.f32 %v1452, %v1589
  %v1621 = vmul.f32 %v1456, %v1589
  %v1622 = vmul.f32 %v1460, %v1589
  %v1623 = vmul.f32 %v1464, %v1589
  %v1624 = vmul.f32 %v1468, %v1589
  %v1625 = vmul.f32 %v1472, %v1589
  %v1626 = vmul.f32 %v1476, %v1589
  %v1627 = vmul.f32 %v1480, %v1589
  %v1628 = vmul.f32 %v1484, %v1589
  %v1629 = vmul.f32 %v1488, %v1589
  %v1630 = vmul.f32 %v1492, %v1589
  %v1631 = vmul.f32 %v1496, %v1589
  %v1632 = vmul.f32 %v1500, %v1589
  %v1633 = vmul.f32 %v1504, %v1589
  %v1634 = vmul.f32 %v1508, %v1589
  %v1635 = vmul.f32 %v1512, %v1589
  %v1636 = vmul.f32 %v1516, %v1589
  %v1637 = vmul.f32 %v1520, %v1589
  %v1638 = vmul.f32 %v1524, %v1589
  %v1639 = vmul.f32 %v1528, %v1589
  %v1640 = vmul.f32 %v1532, %v1589
  %v1641 = vmul.f32 %v1536, %v1589
  %v1642 = vmul.f32 %v1540, %v1589
  %v1643 = vmul.f32 %v1544, %v1589
  %v1644 = vmul.f32 %v1548, %v1589
  %v1645 = vmul.f32 %v1552, %v1589
  %v1646 = vmul.f32 %v1556, %v1589
  %v1647 = vmul.f32 %v1560, %v1589
  %v1648 = vmul.f32 %v1564, %v1589
  %v1649 = vmul.f32 %v1568, %v1589
  %v1650 = vmul.f32 %v1572, %v1589
  %v1651 = vmul.f32 %v1576, %v1589
  %v1652 = vmul.f32 %v1580, %v1589
  %v1653 = vmul.f32 %v1584, %v1589
  %v1654 = vadd.f32 %v1265, %v1590
  %v1655 = vadd.f32 %v1266, %v1591
  %v1656 = vadd.f32 %v1267, %v1592
  %v1657 = vadd.f32 %v1268, %v1593
  %v1658 = vadd.f32 %v1269, %v1594
  %v1659 = vadd.f32 %v1270, %v1595
  %v1660 = vadd.f32 %v1271, %v1596
  %v1661 = vadd.f32 %v1272, %v1597
  %v1662 = vadd.f32 %v1273, %v1598
  %v1663 = vadd.f32 %v1274, %v1599
  %v1664 = vadd.f32 %v1275, %v1600
  %v1665 = vadd.f32 %v1276, %v1601
  %v1666 = vadd.f32 %v1277, %v1602
  %v1667 = vadd.f32 %v1278, %v1603
  %v1668 = vadd.f32 %v1279, %v1604
  %v1669 = vadd.f32 %v1280, %v1605
  %v1670 = vadd.f32 %v1281, %v1606
  %v1671 = vadd.f32 %v1282, %v1607
  %v1672 = vadd.f32 %v1283, %v1608
  %v1673 = vadd.f32 %v1284, %v1609
  %v1674 = vadd.f32 %v1285, %v1610
  %v1675 = vadd.f32 %v1286, %v1611
  %v1676 = vadd.f32 %v1287, %v1612
  %v1677 = vadd.f32 %v1288, %v1613
  %v1678 = vadd.f32 %v1289, %v1614
  %v1679 = vadd.f32 %v1290, %v1615
  %v1680 = vadd.f32 %v1291, %v1616
  %v1681 = vadd.f32 %v1292, %v1617
  %v1682 = vadd.f32 %v1293, %v1618
  %v1683 = vadd.f32 %v1294, %v1619
  %v1684 = vadd.f32 %v1295, %v1620
  %v1685 = vadd.f32 %v1296, %v1621
  %v1686 = vadd.f32 %v1297, %v1622
  %v1687 = vadd.f32 %v1298, %v1623
  %v1688 = vadd.f32 %v1299, %v1624
  %v1689 = vadd.f32 %v1300, %v1625
  %v1690 = vadd.f32 %v1301, %v1626
  %v1691 = vadd.f32 %v1302, %v1627
  %v1692 = vadd.f32 %v1303, %v1628
  %v1693 = vadd.f32 %v1304, %v1629
  %v1694 = vadd.f32 %v1305, %v1630
  %v1695 = vadd.f32 %v1306, %v1631
  %v1696 = vadd.f32 %v1307, %v1632
  %v1697 = vadd.f32 %v1308, %v1633
  %v1698 = vadd.f32 %v1309, %v1634
  %v1699 = vadd.f32 %v1310, %v1635
  %v1700 = vadd.f32 %v1311, %v1636
  %v1701 = vadd.f32 %v1312, %v1637
  %v1702 = vadd.f32 %v1313, %v1638
  %v1703 = vadd.f32 %v1314, %v1639
  %v1704 = vadd.f32 %v1315, %v1640
  %v1705 = vadd.f32 %v1316, %v1641
  %v1706 = vadd.f32 %v1317, %v1642
  %v1707 = vadd.f32 %v1318, %v1643
  %v1708 = vadd.f32 %v1319, %v1644
  %v1709 = vadd.f32 %v1320, %v1645
  %v1710 = vadd.f32 %v1321, %v1646
  %v1711 = vadd.f32 %v1322, %v1647
  %v1712 = vadd.f32 %v1323, %v1648
  %v1713 = vadd.f32 %v1324, %v1649
  %v1714 = vadd.f32 %v1325, %v1650
  %v1715 = vadd.f32 %v1326, %v1651
  %v1716 = vadd.f32 %v1327, %v1652
  %v1717 = vadd.f32 %v1328, %v1653
  %v1718 = vmax.f32 %v1654, 0.0
  %v1719 = vmax.f32 %v1655, 0.0
  %v1720 = vmax.f32 %v1656, 0.0
  %v1721 = vmax.f32 %v1657, 0.0
  %v1722 = vmax.f32 %v1658, 0.0
  %v1723 = vmax.f32 %v1659, 0.0
  %v1724 = vmax.f32 %v1660, 0.0
  %v1725 = vmax.f32 %v1661, 0.0
  %v1726 = vmax.f32 %v1662, 0.0
  %v1727 = vmax.f32 %v1663, 0.0
  %v1728 = vmax.f32 %v1664, 0.0
  %v1729 = vmax.f32 %v1665, 0.0
  %v1730 = vmax.f32 %v1666, 0.0
  %v1731 = vmax.f32 %v1667, 0.0
  %v1732 = vmax.f32 %v1668, 0.0
  %v1733 = vmax.f32 %v1669, 0.0
  %v1734 = vmax.f32 %v1670, 0.0
  %v1735 = vmax.f32 %v1671, 0.0
  %v1736 = vmax.f32 %v1672, 0.0
  %v1737 = vmax.f32 %v1673, 0.0
  %v1738 = vmax.f32 %v1674, 0.0
  %v1739 = vmax.f32 %v1675, 0.0
  %v1740 = vmax.f32 %v1676, 0.0
  %v1741 = vmax.f32 %v1677, 0.0
  %v1742 = vmax.f32 %v1678, 0.0
  %v1743 = vmax.f32 %v1679, 0.0
  %v1744 = vmax.f32 %v1680, 0.0
  %v1745 = vmax.f32 %v1681, 0.0
  %v1746 = vmax.f32 %v1682, 0.0
  %v1747 = vmax.f32 %v1683, 0.0
  %v1748 = vmax.f32 %v1684, 0.0
  %v1749 = vmax.f32 %v1685, 0.0
  %v1750 = vmax.f32 %v1686, 0.0
  %v1751 = vmax.f32 %v1687, 0.0
  %v1752 = vmax.f32 %v1688, 0.0
  %v1753 = vmax.f32 %v1689, 0.0
  %v1754 = vmax.f32 %v1690, 0.0
  %v1755 = vmax.f32 %v1691, 0.0
  %v1756 = vmax.f32 %v1692, 0.0
  %v1757 = vmax.f32 %v1693, 0.0
  %v1758 = vmax.f32 %v1694, 0.0
  %v1759 = vmax.f32 %v1695, 0.0
  %v1760 = vmax.f32 %v1696, 0.0
  %v1761 = vmax.f32 %v1697, 0.0
  %v1762 = vmax.f32 %v1698, 0.0
  %v1763 = vmax.f32 %v1699, 0.0
  %v1764 = vmax.f32 %v1700, 0.0
  %v1765 = vmax.f32 %v1701, 0.0
  %v1766 = vmax.f32 %v1702, 0.0
  %v1767 = vmax.f32 %v1703, 0.0
  %v1768 = vmax.f32 %v1704, 0.0
  %v1769 = vmax.f32 %v1705, 0.0
  %v1770 = vmax.f32 %v1706, 0.0
  %v1771 = vmax.f32 %v1707, 0.0
  %v1772 = vmax.f32 %v1708, 0.0
  %v1773 = vmax.f32 %v1709, 0.0
  %v1774 = vmax.f32 %v1710, 0.0
  %v1775 = vmax.f32 %v1711, 0.0
  %v1776 = vmax.f32 %v1712, 0.0
  %v1777 = vmax.f32 %v1713, 0.0
  %v1778 = vmax.f32 %v1714, 0.0
  %v1779 = vmax.f32 %v1715, 0.0
  %v1780 = vmax.f32 %v1716, 0.0
  %v1781 = vmax.f32 %v1717, 0.0
  %v1782 = vpack.c.bf16 %v1719, %v1718
  %v1783 = vpack.c.bf16 %v1721, %v1720
  %v1784 = vpack.c.bf16 %v1723, %v1722
  %v1785 = vpack.c.bf16 %v1725, %v1724
  %v1786 = vpack.c.bf16 %v1727, %v1726
  %v1787 = vpack.c.bf16 %v1729, %v1728
  %v1788 = vpack.c.bf16 %v1731, %v1730
  %v1789 = vpack.c.bf16 %v1733, %v1732
  %v1790 = vpack.c.bf16 %v1735, %v1734
  %v1791 = vpack.c.bf16 %v1737, %v1736
  %v1792 = vpack.c.bf16 %v1739, %v1738
  %v1793 = vpack.c.bf16 %v1741, %v1740
  %v1794 = vpack.c.bf16 %v1743, %v1742
  %v1795 = vpack.c.bf16 %v1745, %v1744
  %v1796 = vpack.c.bf16 %v1747, %v1746
  %v1797 = vpack.c.bf16 %v1749, %v1748
  %v1798 = vpack.c.bf16 %v1751, %v1750
  %v1799 = vpack.c.bf16 %v1753, %v1752
  %v1800 = vpack.c.bf16 %v1755, %v1754
  %v1801 = vpack.c.bf16 %v1757, %v1756
  %v1802 = vpack.c.bf16 %v1759, %v1758
  %v1803 = vpack.c.bf16 %v1761, %v1760
  %v1804 = vpack.c.bf16 %v1763, %v1762
  %v1805 = vpack.c.bf16 %v1765, %v1764
  %v1806 = vpack.c.bf16 %v1767, %v1766
  %v1807 = vpack.c.bf16 %v1769, %v1768
  %v1808 = vpack.c.bf16 %v1771, %v1770
  %v1809 = vpack.c.bf16 %v1773, %v1772
  %v1810 = vpack.c.bf16 %v1775, %v1774
  %v1811 = vpack.c.bf16 %v1777, %v1776
  %v1812 = vpack.c.bf16 %v1779, %v1778
  %v1813 = vpack.c.bf16 %v1781, %v1780
  %v1814 = vld [vmem:[%s3] sm:$0xf]
  %v1815 = vld [vmem:[%s3 + $0x4] sm:$0xf]
  %v1816 = vld [vmem:[%s3 + $0x8] sm:$0xf]
  %v1817 = vld [vmem:[%s3 + $0xc] sm:$0xf]
  %v1818 = vld [vmem:[%s3 + $0x10] sm:$0xf]
  %v1819 = vld [vmem:[%s3 + $0x14] sm:$0xf]
  %v1820 = vld [vmem:[%s3 + $0x18] sm:$0xf]
  %v1821 = vld [vmem:[%s3 + $0x1c] sm:$0xf]
  %v1822 = vld [vmem:[%s3 + $0x20] sm:$0xf]
  %v1823 = vld [vmem:[%s3 + $0x24] sm:$0xf]
  %v1824 = vld [vmem:[%s3 + $0x28] sm:$0xf]
  %v1825 = vld [vmem:[%s3 + $0x2c] sm:$0xf]
  %v1826 = vld [vmem:[%s3 + $0x30] sm:$0xf]
  %v1827 = vld [vmem:[%s3 + $0x34] sm:$0xf]
  %v1828 = vld [vmem:[%s3 + $0x38] sm:$0xf]
  %v1829 = vld [vmem:[%s3 + $0x3c] sm:$0xf]
  %v1830 = vld [vmem:[%s4] sm:$0x1]
  %v1832 = vlaneseq
  %v1833 = vshrl.u32 %v1832, 7
  %v1834 = vsub.s32 0, %v1833
  %v1835 = vrot.slane %v1830, %v1834
  %v1853 = vunpack.c.l.b16 %v1814
  %v1854 = vunpack.c.l.b16 %v1815
  %v1855 = vunpack.c.l.b16 %v1816
  %v1856 = vunpack.c.l.b16 %v1817
  %v1857 = vunpack.c.l.b16 %v1818
  %v1858 = vunpack.c.l.b16 %v1819
  %v1859 = vunpack.c.l.b16 %v1820
  %v1860 = vunpack.c.l.b16 %v1821
  %v1861 = vunpack.c.l.b16 %v1822
  %v1862 = vunpack.c.l.b16 %v1823
  %v1863 = vunpack.c.l.b16 %v1824
  %v1864 = vunpack.c.l.b16 %v1825
  %v1865 = vunpack.c.l.b16 %v1826
  %v1866 = vunpack.c.l.b16 %v1827
  %v1867 = vunpack.c.l.b16 %v1828
  %v1868 = vunpack.c.l.b16 %v1829
  %v1869 = vpack.c.b16 %v1854, %v1853
  %v1870 = vpack.c.b16 %v1856, %v1855
  %v1871 = vpack.c.b16 %v1858, %v1857
  %v1872 = vpack.c.b16 %v1860, %v1859
  %v1873 = vpack.c.b16 %v1862, %v1861
  %v1874 = vpack.c.b16 %v1864, %v1863
  %v1875 = vpack.c.b16 %v1866, %v1865
  %v1876 = vpack.c.b16 %v1868, %v1867
  %1885 = vmatprep.subr.bf16.mxu0 0
  %1886 = vmatpush1.bf16.msra.mxu0 %v1876
  %1887 = vmatprep.subr.bf16.mxu0 0
  %1888 = vmatpush1.bf16.msra.mxu0 %v1875
  %1889 = vmatprep.subr.bf16.mxu0 0
  %1890 = vmatpush1.bf16.msra.mxu0 %v1874
  %1891 = vmatprep.subr.bf16.mxu0 0
  %1892 = vmatpush1.bf16.msra.mxu0 %v1873
  %1893 = vmatprep.subr.bf16.mxu0 0
  %1894 = vmatpush1.bf16.msra.mxu0 %v1872
  %1895 = vmatprep.subr.bf16.mxu0 0
  %1896 = vmatpush1.bf16.msra.mxu0 %v1871
  %1897 = vmatprep.subr.bf16.mxu0 0
  %1898 = vmatpush1.bf16.msra.mxu0 %v1870
  %1899 = vmatprep.subr.bf16.mxu0 0
  %1900 = vmatpush1.bf16.msra.mxu0 %v1869
  %1901 = vmatprep.subr.bf16.mxu0 0
  %1902 = vmatpush2.bf16.msra.mxu0 0
  %1903 = vmatprep.subr.bf16.mxu0 0
  %1904 = vmatpush2.bf16.msra.mxu0 0
  %1905 = vmatprep.subr.bf16.mxu0 0
  %1906 = vmatpush2.bf16.msra.mxu0 0
  %1907 = vmatprep.subr.bf16.mxu0 0
  %1908 = vmatpush2.bf16.msra.mxu0 0
  %1909 = vmatprep.subr.bf16.mxu0 0
  %1910 = vmatpush2.bf16.msra.mxu0 0
  %1911 = vmatprep.subr.bf16.mxu0 0
  %1912 = vmatpush2.bf16.msra.mxu0 0
  %1913 = vmatprep.subr.bf16.mxu0 0
  %1914 = vmatpush2.bf16.msra.mxu0 0
  %1915 = vmatprep.subr.bf16.mxu0 0
  %1916 = vmatpush2.bf16.msra.mxu0 0
  %1917 = vmatprep.mubr.bf16.mxu0 0
  %1918 = vmatmul.mubr.bf16.gmra.mxu0 %v1782
  %v1919 = vpop.f32.mrf.mxu0
  %v1920 = vadd.f32 %v1835, %v1919
  %v1921 = vpop.f32.mrf.mxu0
  %v1922 = vpop.f32.mrf.mxu0
  %v1923 = vadd.f32 %v1835, %v1922
  %v1924 = vpop.f32.mrf.mxu0
  %1925 = vmatprep.mubr.bf16.mxu0 0
  %1926 = vmatmul.mubr.bf16.gmra.mxu0 %v1783
  %v1927 = vpop.f32.mrf.mxu0
  %v1928 = vadd.f32 %v1835, %v1927
  %v1929 = vpop.f32.mrf.mxu0
  %v1930 = vpop.f32.mrf.mxu0
  %v1931 = vadd.f32 %v1835, %v1930
  %v1932 = vpop.f32.mrf.mxu0
  %1933 = vmatprep.mubr.bf16.mxu0 0
  %1934 = vmatmul.mubr.bf16.gmra.mxu0 %v1784
  %v1935 = vpop.f32.mrf.mxu0
  %v1936 = vadd.f32 %v1835, %v1935
  %v1937 = vpop.f32.mrf.mxu0
  %v1938 = vpop.f32.mrf.mxu0
  %v1939 = vadd.f32 %v1835, %v1938
  %v1940 = vpop.f32.mrf.mxu0
  %1941 = vmatprep.mubr.bf16.mxu0 0
  %1942 = vmatmul.mubr.bf16.gmra.mxu0 %v1785
  %v1943 = vpop.f32.mrf.mxu0
  %v1944 = vadd.f32 %v1835, %v1943
  %v1945 = vpop.f32.mrf.mxu0
  %v1946 = vpop.f32.mrf.mxu0
  %v1947 = vadd.f32 %v1835, %v1946
  %v1948 = vpop.f32.mrf.mxu0
  %1949 = vmatprep.mubr.bf16.mxu0 0
  %1950 = vmatmul.mubr.bf16.gmra.mxu0 %v1786
  %v1951 = vpop.f32.mrf.mxu0
  %v1952 = vadd.f32 %v1835, %v1951
  %v1953 = vpop.f32.mrf.mxu0
  %v1954 = vpop.f32.mrf.mxu0
  %v1955 = vadd.f32 %v1835, %v1954
  %v1956 = vpop.f32.mrf.mxu0
  %1957 = vmatprep.mubr.bf16.mxu0 0
  %1958 = vmatmul.mubr.bf16.gmra.mxu0 %v1787
  %v1959 = vpop.f32.mrf.mxu0
  %v1960 = vadd.f32 %v1835, %v1959
  %v1961 = vpop.f32.mrf.mxu0
  %v1962 = vpop.f32.mrf.mxu0
  %v1963 = vadd.f32 %v1835, %v1962
  %v1964 = vpop.f32.mrf.mxu0
  %1965 = vmatprep.mubr.bf16.mxu0 0
  %1966 = vmatmul.mubr.bf16.gmra.mxu0 %v1788
  %v1967 = vpop.f32.mrf.mxu0
  %v1968 = vadd.f32 %v1835, %v1967
  %v1969 = vpop.f32.mrf.mxu0
  %v1970 = vpop.f32.mrf.mxu0
  %v1971 = vadd.f32 %v1835, %v1970
  %v1972 = vpop.f32.mrf.mxu0
  %1973 = vmatprep.mubr.bf16.mxu0 0
  %1974 = vmatmul.mubr.bf16.gmra.mxu0 %v1789
  %v1975 = vpop.f32.mrf.mxu0
  %v1976 = vadd.f32 %v1835, %v1975
  %v1977 = vpop.f32.mrf.mxu0
  %v1978 = vpop.f32.mrf.mxu0
  %v1979 = vadd.f32 %v1835, %v1978
  %v1980 = vpop.f32.mrf.mxu0
  %1981 = vmatprep.mubr.bf16.mxu0 0
  %1982 = vmatmul.mubr.bf16.gmra.mxu0 %v1790
  %v1983 = vpop.f32.mrf.mxu0
  %v1984 = vadd.f32 %v1835, %v1983
  %v1985 = vpop.f32.mrf.mxu0
  %v1986 = vpop.f32.mrf.mxu0
  %v1987 = vadd.f32 %v1835, %v1986
  %v1988 = vpop.f32.mrf.mxu0
  %1989 = vmatprep.mubr.bf16.mxu0 0
  %1990 = vmatmul.mubr.bf16.gmra.mxu0 %v1791
  %v1991 = vpop.f32.mrf.mxu0
  %v1992 = vadd.f32 %v1835, %v1991
  %v1993 = vpop.f32.mrf.mxu0
  %v1994 = vpop.f32.mrf.mxu0
  %v1995 = vadd.f32 %v1835, %v1994
  %v1996 = vpop.f32.mrf.mxu0
  %1997 = vmatprep.mubr.bf16.mxu0 0
  %1998 = vmatmul.mubr.bf16.gmra.mxu0 %v1792
  %v1999 = vpop.f32.mrf.mxu0
  %v2000 = vadd.f32 %v1835, %v1999
  %v2001 = vpop.f32.mrf.mxu0
  %v2002 = vpop.f32.mrf.mxu0
  %v2003 = vadd.f32 %v1835, %v2002
  %v2004 = vpop.f32.mrf.mxu0
  %2005 = vmatprep.mubr.bf16.mxu0 0
  %2006 = vmatmul.mubr.bf16.gmra.mxu0 %v1793
  %v2007 = vpop.f32.mrf.mxu0
  %v2008 = vadd.f32 %v1835, %v2007
  %v2009 = vpop.f32.mrf.mxu0
  %v2010 = vpop.f32.mrf.mxu0
  %v2011 = vadd.f32 %v1835, %v2010
  %v2012 = vpop.f32.mrf.mxu0
  %2013 = vmatprep.mubr.bf16.mxu0 0
  %2014 = vmatmul.mubr.bf16.gmra.mxu0 %v1794
  %v2015 = vpop.f32.mrf.mxu0
  %v2016 = vadd.f32 %v1835, %v2015
  %v2017 = vpop.f32.mrf.mxu0
  %v2018 = vpop.f32.mrf.mxu0
  %v2019 = vadd.f32 %v1835, %v2018
  %v2020 = vpop.f32.mrf.mxu0
  %2021 = vmatprep.mubr.bf16.mxu0 0
  %2022 = vmatmul.mubr.bf16.gmra.mxu0 %v1795
  %v2023 = vpop.f32.mrf.mxu0
  %v2024 = vadd.f32 %v1835, %v2023
  %v2025 = vpop.f32.mrf.mxu0
  %v2026 = vpop.f32.mrf.mxu0
  %v2027 = vadd.f32 %v1835, %v2026
  %v2028 = vpop.f32.mrf.mxu0
  %2029 = vmatprep.mubr.bf16.mxu0 0
  %2030 = vmatmul.mubr.bf16.gmra.mxu0 %v1796
  %v2031 = vpop.f32.mrf.mxu0
  %v2032 = vadd.f32 %v1835, %v2031
  %v2033 = vpop.f32.mrf.mxu0
  %v2034 = vpop.f32.mrf.mxu0
  %v2035 = vadd.f32 %v1835, %v2034
  %v2036 = vpop.f32.mrf.mxu0
  %2037 = vmatprep.mubr.bf16.mxu0 0
  %2038 = vmatmul.mubr.bf16.gmra.mxu0 %v1797
  %v2039 = vpop.f32.mrf.mxu0
  %v2040 = vadd.f32 %v1835, %v2039
  %v2041 = vpop.f32.mrf.mxu0
  %v2042 = vpop.f32.mrf.mxu0
  %v2043 = vadd.f32 %v1835, %v2042
  %v2044 = vpop.f32.mrf.mxu0
  %2045 = vmatprep.mubr.bf16.mxu0 0
  %2046 = vmatmul.mubr.bf16.gmra.mxu0 %v1798
  %v2047 = vpop.f32.mrf.mxu0
  %v2048 = vadd.f32 %v1835, %v2047
  %v2049 = vpop.f32.mrf.mxu0
  %v2050 = vpop.f32.mrf.mxu0
  %v2051 = vadd.f32 %v1835, %v2050
  %v2052 = vpop.f32.mrf.mxu0
  %2053 = vmatprep.mubr.bf16.mxu0 0
  %2054 = vmatmul.mubr.bf16.gmra.mxu0 %v1799
  %v2055 = vpop.f32.mrf.mxu0
  %v2056 = vadd.f32 %v1835, %v2055
  %v2057 = vpop.f32.mrf.mxu0
  %v2058 = vpop.f32.mrf.mxu0
  %v2059 = vadd.f32 %v1835, %v2058
  %v2060 = vpop.f32.mrf.mxu0
  %2061 = vmatprep.mubr.bf16.mxu0 0
  %2062 = vmatmul.mubr.bf16.gmra.mxu0 %v1800
  %v2063 = vpop.f32.mrf.mxu0
  %v2064 = vadd.f32 %v1835, %v2063
  %v2065 = vpop.f32.mrf.mxu0
  %v2066 = vpop.f32.mrf.mxu0
  %v2067 = vadd.f32 %v1835, %v2066
  %v2068 = vpop.f32.mrf.mxu0
  %2069 = vmatprep.mubr.bf16.mxu0 0
  %2070 = vmatmul.mubr.bf16.gmra.mxu0 %v1801
  %v2071 = vpop.f32.mrf.mxu0
  %v2072 = vadd.f32 %v1835, %v2071
  %v2073 = vpop.f32.mrf.mxu0
  %v2074 = vpop.f32.mrf.mxu0
  %v2075 = vadd.f32 %v1835, %v2074
  %v2076 = vpop.f32.mrf.mxu0
  %2077 = vmatprep.mubr.bf16.mxu0 0
  %2078 = vmatmul.mubr.bf16.gmra.mxu0 %v1802
  %v2079 = vpop.f32.mrf.mxu0
  %v2080 = vadd.f32 %v1835, %v2079
  %v2081 = vpop.f32.mrf.mxu0
  %v2082 = vpop.f32.mrf.mxu0
  %v2083 = vadd.f32 %v1835, %v2082
  %v2084 = vpop.f32.mrf.mxu0
  %2085 = vmatprep.mubr.bf16.mxu0 0
  %2086 = vmatmul.mubr.bf16.gmra.mxu0 %v1803
  %v2087 = vpop.f32.mrf.mxu0
  %v2088 = vadd.f32 %v1835, %v2087
  %v2089 = vpop.f32.mrf.mxu0
  %v2090 = vpop.f32.mrf.mxu0
  %v2091 = vadd.f32 %v1835, %v2090
  %v2092 = vpop.f32.mrf.mxu0
  %2093 = vmatprep.mubr.bf16.mxu0 0
  %2094 = vmatmul.mubr.bf16.gmra.mxu0 %v1804
  %v2095 = vpop.f32.mrf.mxu0
  %v2096 = vadd.f32 %v1835, %v2095
  %v2097 = vpop.f32.mrf.mxu0
  %v2098 = vpop.f32.mrf.mxu0
  %v2099 = vadd.f32 %v1835, %v2098
  %v2100 = vpop.f32.mrf.mxu0
  %2101 = vmatprep.mubr.bf16.mxu0 0
  %2102 = vmatmul.mubr.bf16.gmra.mxu0 %v1805
  %v2103 = vpop.f32.mrf.mxu0
  %v2104 = vadd.f32 %v1835, %v2103
  %v2105 = vpop.f32.mrf.mxu0
  %v2106 = vpop.f32.mrf.mxu0
  %v2107 = vadd.f32 %v1835, %v2106
  %v2108 = vpop.f32.mrf.mxu0
  %2109 = vmatprep.mubr.bf16.mxu0 0
  %2110 = vmatmul.mubr.bf16.gmra.mxu0 %v1806
  %v2111 = vpop.f32.mrf.mxu0
  %v2112 = vadd.f32 %v1835, %v2111
  %v2113 = vpop.f32.mrf.mxu0
  %v2114 = vpop.f32.mrf.mxu0
  %v2115 = vadd.f32 %v1835, %v2114
  %v2116 = vpop.f32.mrf.mxu0
  %2117 = vmatprep.mubr.bf16.mxu0 0
  %2118 = vmatmul.mubr.bf16.gmra.mxu0 %v1807
  %v2119 = vpop.f32.mrf.mxu0
  %v2120 = vadd.f32 %v1835, %v2119
  %v2121 = vpop.f32.mrf.mxu0
  %v2122 = vpop.f32.mrf.mxu0
  %v2123 = vadd.f32 %v1835, %v2122
  %v2124 = vpop.f32.mrf.mxu0
  %2125 = vmatprep.mubr.bf16.mxu0 0
  %2126 = vmatmul.mubr.bf16.gmra.mxu0 %v1808
  %v2127 = vpop.f32.mrf.mxu0
  %v2128 = vadd.f32 %v1835, %v2127
  %v2129 = vpop.f32.mrf.mxu0
  %v2130 = vpop.f32.mrf.mxu0
  %v2131 = vadd.f32 %v1835, %v2130
  %v2132 = vpop.f32.mrf.mxu0
  %2133 = vmatprep.mubr.bf16.mxu0 0
  %2134 = vmatmul.mubr.bf16.gmra.mxu0 %v1809
  %v2135 = vpop.f32.mrf.mxu0
  %v2136 = vadd.f32 %v1835, %v2135
  %v2137 = vpop.f32.mrf.mxu0
  %v2138 = vpop.f32.mrf.mxu0
  %v2139 = vadd.f32 %v1835, %v2138
  %v2140 = vpop.f32.mrf.mxu0
  %2141 = vmatprep.mubr.bf16.mxu0 0
  %2142 = vmatmul.mubr.bf16.gmra.mxu0 %v1810
  %v2143 = vpop.f32.mrf.mxu0
  %v2144 = vadd.f32 %v1835, %v2143
  %v2145 = vpop.f32.mrf.mxu0
  %v2146 = vpop.f32.mrf.mxu0
  %v2147 = vadd.f32 %v1835, %v2146
  %v2148 = vpop.f32.mrf.mxu0
  %2149 = vmatprep.mubr.bf16.mxu0 0
  %2150 = vmatmul.mubr.bf16.gmra.mxu0 %v1811
  %v2151 = vpop.f32.mrf.mxu0
  %v2152 = vadd.f32 %v1835, %v2151
  %v2153 = vpop.f32.mrf.mxu0
  %v2154 = vpop.f32.mrf.mxu0
  %v2155 = vadd.f32 %v1835, %v2154
  %v2156 = vpop.f32.mrf.mxu0
  %2157 = vmatprep.mubr.bf16.mxu0 0
  %2158 = vmatmul.mubr.bf16.gmra.mxu0 %v1812
  %v2159 = vpop.f32.mrf.mxu0
  %v2160 = vadd.f32 %v1835, %v2159
  %v2161 = vpop.f32.mrf.mxu0
  %v2162 = vpop.f32.mrf.mxu0
  %v2163 = vadd.f32 %v1835, %v2162
  %v2164 = vpop.f32.mrf.mxu0
  %2165 = vmatprep.mubr.bf16.mxu0 0
  %2166 = vmatmul.mubr.bf16.gmra.mxu0 %v1813
  %v2167 = vpop.f32.mrf.mxu0
  %v2168 = vadd.f32 %v1835, %v2167
  %v2169 = vpop.f32.mrf.mxu0
  %v2170 = vpop.f32.mrf.mxu0
  %v2171 = vadd.f32 %v1835, %v2170
  %v2172 = vpop.f32.mrf.mxu0
  %2173 = vdwg.mxu0
  %v2174 = vmax.f32 %v1920, 0.0
  %v2175 = vmax.f32 %v1923, 0.0
  %v2176 = vmax.f32 %v1928, 0.0
  %v2177 = vmax.f32 %v1931, 0.0
  %v2178 = vmax.f32 %v1936, 0.0
  %v2179 = vmax.f32 %v1939, 0.0
  %v2180 = vmax.f32 %v1944, 0.0
  %v2181 = vmax.f32 %v1947, 0.0
  %v2182 = vmax.f32 %v1952, 0.0
  %v2183 = vmax.f32 %v1955, 0.0
  %v2184 = vmax.f32 %v1960, 0.0
  %v2185 = vmax.f32 %v1963, 0.0
  %v2186 = vmax.f32 %v1968, 0.0
  %v2187 = vmax.f32 %v1971, 0.0
  %v2188 = vmax.f32 %v1976, 0.0
  %v2189 = vmax.f32 %v1979, 0.0
  %v2190 = vmax.f32 %v1984, 0.0
  %v2191 = vmax.f32 %v1987, 0.0
  %v2192 = vmax.f32 %v1992, 0.0
  %v2193 = vmax.f32 %v1995, 0.0
  %v2194 = vmax.f32 %v2000, 0.0
  %v2195 = vmax.f32 %v2003, 0.0
  %v2196 = vmax.f32 %v2008, 0.0
  %v2197 = vmax.f32 %v2011, 0.0
  %v2198 = vmax.f32 %v2016, 0.0
  %v2199 = vmax.f32 %v2019, 0.0
  %v2200 = vmax.f32 %v2024, 0.0
  %v2201 = vmax.f32 %v2027, 0.0
  %v2202 = vmax.f32 %v2032, 0.0
  %v2203 = vmax.f32 %v2035, 0.0
  %v2204 = vmax.f32 %v2040, 0.0
  %v2205 = vmax.f32 %v2043, 0.0
  %v2206 = vmax.f32 %v2048, 0.0
  %v2207 = vmax.f32 %v2051, 0.0
  %v2208 = vmax.f32 %v2056, 0.0
  %v2209 = vmax.f32 %v2059, 0.0
  %v2210 = vmax.f32 %v2064, 0.0
  %v2211 = vmax.f32 %v2067, 0.0
  %v2212 = vmax.f32 %v2072, 0.0
  %v2213 = vmax.f32 %v2075, 0.0
  %v2214 = vmax.f32 %v2080, 0.0
  %v2215 = vmax.f32 %v2083, 0.0
  %v2216 = vmax.f32 %v2088, 0.0
  %v2217 = vmax.f32 %v2091, 0.0
  %v2218 = vmax.f32 %v2096, 0.0
  %v2219 = vmax.f32 %v2099, 0.0
  %v2220 = vmax.f32 %v2104, 0.0
  %v2221 = vmax.f32 %v2107, 0.0
  %v2222 = vmax.f32 %v2112, 0.0
  %v2223 = vmax.f32 %v2115, 0.0
  %v2224 = vmax.f32 %v2120, 0.0
  %v2225 = vmax.f32 %v2123, 0.0
  %v2226 = vmax.f32 %v2128, 0.0
  %v2227 = vmax.f32 %v2131, 0.0
  %v2228 = vmax.f32 %v2136, 0.0
  %v2229 = vmax.f32 %v2139, 0.0
  %v2230 = vmax.f32 %v2144, 0.0
  %v2231 = vmax.f32 %v2147, 0.0
  %v2232 = vmax.f32 %v2152, 0.0
  %v2233 = vmax.f32 %v2155, 0.0
  %v2234 = vmax.f32 %v2160, 0.0
  %v2235 = vmax.f32 %v2163, 0.0
  %v2236 = vmax.f32 %v2168, 0.0
  %v2237 = vmax.f32 %v2171, 0.0
  %v2238 = vld [vmem:[%s5] sm:$0xf]
  %v2239 = vpack.c.bf16 %v2175, %v2174
  %v2240 = vpack.c.bf16 %v2177, %v2176
  %v2241 = vpack.c.bf16 %v2179, %v2178
  %v2242 = vpack.c.bf16 %v2181, %v2180
  %v2243 = vpack.c.bf16 %v2183, %v2182
  %v2244 = vpack.c.bf16 %v2185, %v2184
  %v2245 = vpack.c.bf16 %v2187, %v2186
  %v2246 = vpack.c.bf16 %v2189, %v2188
  %v2247 = vpack.c.bf16 %v2191, %v2190
  %v2248 = vpack.c.bf16 %v2193, %v2192
  %v2249 = vpack.c.bf16 %v2195, %v2194
  %v2250 = vpack.c.bf16 %v2197, %v2196
  %v2251 = vpack.c.bf16 %v2199, %v2198
  %v2252 = vpack.c.bf16 %v2201, %v2200
  %v2253 = vpack.c.bf16 %v2203, %v2202
  %v2254 = vpack.c.bf16 %v2205, %v2204
  %v2255 = vpack.c.bf16 %v2207, %v2206
  %v2256 = vpack.c.bf16 %v2209, %v2208
  %v2257 = vpack.c.bf16 %v2211, %v2210
  %v2258 = vpack.c.bf16 %v2213, %v2212
  %v2259 = vpack.c.bf16 %v2215, %v2214
  %v2260 = vpack.c.bf16 %v2217, %v2216
  %v2261 = vpack.c.bf16 %v2219, %v2218
  %v2262 = vpack.c.bf16 %v2221, %v2220
  %v2263 = vpack.c.bf16 %v2223, %v2222
  %v2264 = vpack.c.bf16 %v2225, %v2224
  %v2265 = vpack.c.bf16 %v2227, %v2226
  %v2266 = vpack.c.bf16 %v2229, %v2228
  %v2267 = vpack.c.bf16 %v2231, %v2230
  %v2268 = vpack.c.bf16 %v2233, %v2232
  %v2269 = vpack.c.bf16 %v2235, %v2234
  %v2270 = vpack.c.bf16 %v2237, %v2236
  %v2271 = vld [vmem:[%s6] sm:$0xff]
  %2273 = vset.pattern.permute.xlu0 0
  %2274 = vperm.xlu0 %2273, %v2271
  %v2275 = vpop.permute.xlu0 %2274
  %2277 = vmatprep.subr.bf16.mxu0 0
  %2278 = vmatpush1.bf16.xpose.msra.mxu0 %v2246
  %2279 = vmatprep.subr.bf16.mxu0 0
  %2280 = vmatpush1.bf16.xpose.msra.mxu0 %v2245
  %2281 = vmatprep.subr.bf16.mxu0 0
  %2282 = vmatpush1.bf16.xpose.msra.mxu0 %v2244
  %2283 = vmatprep.subr.bf16.mxu0 0
  %2284 = vmatpush1.bf16.xpose.msra.mxu0 %v2243
  %2285 = vmatprep.subr.bf16.mxu0 0
  %2286 = vmatpush1.bf16.xpose.msra.mxu0 %v2242
  %2287 = vmatprep.subr.bf16.mxu0 0
  %2288 = vmatpush1.bf16.xpose.msra.mxu0 %v2241
  %2289 = vmatprep.subr.bf16.mxu0 0
  %2290 = vmatpush1.bf16.xpose.msra.mxu0 %v2240
  %2291 = vmatprep.subr.bf16.mxu0 0
  %2292 = vmatpush1.bf16.xpose.msra.mxu0 %v2239
  %2293 = vmatprep.subr.bf16.mxu0 0
  %2294 = vmatpush2.bf16.xpose.msra.mxu0 %v2254
  %2295 = vmatprep.subr.bf16.mxu0 0
  %2296 = vmatpush2.bf16.xpose.msra.mxu0 %v2253
  %2297 = vmatprep.subr.bf16.mxu0 0
  %2298 = vmatpush2.bf16.xpose.msra.mxu0 %v2252
  %2299 = vmatprep.subr.bf16.mxu0 0
  %2300 = vmatpush2.bf16.xpose.msra.mxu0 %v2251
  %2301 = vmatprep.subr.bf16.mxu0 0
  %2302 = vmatpush2.bf16.xpose.msra.mxu0 %v2250
  %2303 = vmatprep.subr.bf16.mxu0 0
  %2304 = vmatpush2.bf16.xpose.msra.mxu0 %v2249
  %2305 = vmatprep.subr.bf16.mxu0 0
  %2306 = vmatpush2.bf16.xpose.msra.mxu0 %v2248
  %2307 = vmatprep.subr.bf16.mxu0 0
  %2308 = vmatpush2.bf16.xpose.msra.mxu0 %v2247
  %2309 = vmatprep.mubr.bf16.mxu0 0
  %2310 = vmatmul.mubr.bf16.gmra.mxu0 %v2238
  %v2311 = vpop.f32.mrf.mxu0
  %v2312 = vadd.f32 %v2275, %v2311
  %v2313 = vpop.f32.mrf.mxu0
  %v2314 = vadd.f32 %v2275, %v2313
  %v2315 = vpop.f32.mrf.mxu0
  %v2316 = vpop.f32.mrf.mxu0
  %2317 = vdwg.mxu0
  %2318 = vmatprep.subr.bf16.mxu0 0
  %2319 = vmatpush1.bf16.xpose.msra.mxu0 %v2262
  %2320 = vmatprep.subr.bf16.mxu0 0
  %2321 = vmatpush1.bf16.xpose.msra.mxu0 %v2261
  %2322 = vmatprep.subr.bf16.mxu0 0
  %2323 = vmatpush1.bf16.xpose.msra.mxu0 %v2260
  %2324 = vmatprep.subr.bf16.mxu0 0
  %2325 = vmatpush1.bf16.xpose.msra.mxu0 %v2259
  %2326 = vmatprep.subr.bf16.mxu0 0
  %2327 = vmatpush1.bf16.xpose.msra.mxu0 %v2258
  %2328 = vmatprep.subr.bf16.mxu0 0
  %2329 = vmatpush1.bf16.xpose.msra.mxu0 %v2257
  %2330 = vmatprep.subr.bf16.mxu0 0
  %2331 = vmatpush1.bf16.xpose.msra.mxu0 %v2256
  %2332 = vmatprep.subr.bf16.mxu0 0
  %2333 = vmatpush1.bf16.xpose.msra.mxu0 %v2255
  %2334 = vmatprep.subr.bf16.mxu0 0
  %2335 = vmatpush2.bf16.xpose.msra.mxu0 %v2270
  %2336 = vmatprep.subr.bf16.mxu0 0
  %2337 = vmatpush2.bf16.xpose.msra.mxu0 %v2269
  %2338 = vmatprep.subr.bf16.mxu0 0
  %2339 = vmatpush2.bf16.xpose.msra.mxu0 %v2268
  %2340 = vmatprep.subr.bf16.mxu0 0
  %2341 = vmatpush2.bf16.xpose.msra.mxu0 %v2267
  %2342 = vmatprep.subr.bf16.mxu0 0
  %2343 = vmatpush2.bf16.xpose.msra.mxu0 %v2266
  %2344 = vmatprep.subr.bf16.mxu0 0
  %2345 = vmatpush2.bf16.xpose.msra.mxu0 %v2265
  %2346 = vmatprep.subr.bf16.mxu0 0
  %2347 = vmatpush2.bf16.xpose.msra.mxu0 %v2264
  %2348 = vmatprep.subr.bf16.mxu0 0
  %2349 = vmatpush2.bf16.xpose.msra.mxu0 %v2263
  %2350 = vmatprep.mubr.bf16.mxu0 0
  %2351 = vmatmul.mubr.bf16.gmra.mxu0 %v2238
  %v2352 = vpop.f32.mrf.mxu0
  %v2353 = vadd.f32 %v2275, %v2352
  %v2354 = vpop.f32.mrf.mxu0
  %v2355 = vadd.f32 %v2275, %v2354
  %v2356 = vpop.f32.mrf.mxu0
  %v2357 = vpop.f32.mrf.mxu0
  %2358 = vdwg.mxu0
  %2359 = vst [vmem:[%s7] sm:$0xff] %v2312
  %2360 = vst [vmem:[%s7 + $0x8] sm:$0xff] %v2314
  %2361 = vst [vmem:[%s7 + $0x10] sm:$0xff] %v2353
  %2362 = vst [vmem:[%s7 + $0x18] sm:$0xff] %v2355
  // Predicated region
  $region30: #{dqn_forward.1} parent=0 // pred_check
    _
  $region31: #{dqn_forward.1} parent=0 // pred_check_branch
    %2364 = sbr.rel (0) target = $region33
  $region32: #{dqn_forward.1} parent=0 // pred_region
    _
  $region33: #{dqn_forward.1} parent=0 // pred_fallthru
    _
  // Predicated region
  $region34: #{dqn_forward.1} parent=0 // pred_check
    _
  $region35: #{dqn_forward.1} parent=0 // pred_check_branch
    %2366 = sbr.rel (0) target = $region37
  $region36: #{dqn_forward.1} parent=0 // pred_region
    _
  $region37: #{dqn_forward.1} parent=0 // pred_fallthru
    _

</llo_original>
